<compile_context>
chip_gen: v7x
topology: tpu7x:2x2x1
jax: 0.10.0
libtpu: 0.0.40
codegen_flags: <defaults>
</compile_context>

<pallas_src>
import functools
import math

import jax
import jax.numpy as jnp
from jax.experimental import pallas as pl
from jax.experimental.pallas import tpu as pltpu


def _round_up(a, b):
    return ((a + b - 1) // b) * b


def _pick_tile(requested, total):
    """Largest multiple of 128 that divides `total` and is <= requested."""
    t = max(128, (min(requested, total) // 128) * 128)
    while total % t:
        t -= 128
    return t


# ---------------------------------------------------------------------------
# Kernel 1: per-position projections (input_conv -> residual x1, Q, K^T, V).
# ---------------------------------------------------------------------------
def _proj_kernel(x_ref, wi_ref, bi_ref, wqkv_ref, bqkv_ref,
                 x1_ref, q_ref, kt_ref, v_ref):
    cp = x1_ref.shape[-1]
    # input_conv: bf16 operands, f32 accumulation (f32xf32 MXU is emulated and
    # several times slower on every generation).
    x1 = jnp.dot(x_ref[0].astype(jnp.bfloat16), wi_ref[...],
                 preferred_element_type=jnp.float32) + bi_ref[...]
    x1_ref[0] = x1
    # Fused query|key|value 1x1 convs.
    qkv = jnp.dot(x1.astype(jnp.bfloat16), wqkv_ref[...],
                  preferred_element_type=jnp.float32) + bqkv_ref[...]
    q_ref[0] = qkv[:, :cp].astype(jnp.bfloat16)
    # Store K transposed (C, HW) once here so the energy matmul in the flash
    # kernel is a plain (tq,C)x(C,tk) contraction with no per-step transpose.
    kt_ref[0] = qkv[:, cp:2 * cp].T.astype(jnp.bfloat16)
    v_ref[0] = qkv[:, 2 * cp:].astype(jnp.bfloat16)


# ---------------------------------------------------------------------------
# Kernel 2: flash attention (online softmax) + gamma * out + x1 residual.
# ---------------------------------------------------------------------------
def _flash_kernel(x1q_ref, q_ref, kt_ref, v_ref, gamma_ref, o_ref,
                  m_s, l_s, acc_s, *, hw_valid, masked):
    ki = pl.program_id(2)

    @pl.when(ki == 0)
    def _init():
        m_s[...] = jnp.full_like(m_s, -jnp.inf)
        l_s[...] = jnp.zeros_like(l_s)
        acc_s[...] = jnp.zeros_like(acc_s)

    # energy tile (tq, tk): bf16 MXU operands, f32 accumulation.
    s = jnp.dot(q_ref[0], kt_ref[0], preferred_element_type=jnp.float32)
    if masked:  # static: only emitted when HW was padded
        tk = s.shape[-1]
        col = ki * tk + jax.lax.broadcasted_iota(jnp.int32, s.shape, 1)
        s = jnp.where(col < hw_valid, s, -1e30)

    # Online softmax; stats kept in f32.  (bf16-exp is a v6e/v7x-only
    # micro-opt, skipped to stay generation-portable — v5e has no bf16 EUP.)
    m_new = jnp.maximum(m_s[...], jnp.max(s, axis=-1, keepdims=True))
    alpha = jnp.exp(m_s[...] - m_new)
    p = jnp.exp(s - m_new)
    l_s[...] = alpha * l_s[...] + jnp.sum(p, axis=-1, keepdims=True)
    acc_s[...] = alpha * acc_s[...] + jnp.dot(
        p.astype(jnp.bfloat16), v_ref[0], preferred_element_type=jnp.float32)
    m_s[...] = m_new

    @pl.when(ki == pl.num_programs(2) - 1)
    def _finalize():
        gamma = gamma_ref[0, 0]                       # scalar from SMEM
        out = acc_s[...] * pl.reciprocal(l_s[...], approx=True)
        o_ref[0] = (gamma * out + x1q_ref[0]).astype(o_ref.dtype)


def eac_module_forward(x_nchw, params, *, tq=256, tk=512, tp=256):
    """x_nchw: (B, Cin, H, W) float32.  Returns (B, Cout, H, W) float32."""
    B, Cin, H, W = x_nchw.shape
    HW = H * W
    wi, bi, wq, bq, wk, bk, wv, bv, gamma = params
    Cout = wi.shape[1]

    # Channel dim padded to a multiple of 128 lanes (padding is exact: padded
    # channels of x1/Q/K/V are 0).
    cp = _round_up(Cout, 128)
    pc = cp - Cout
    # Spatial dim padded to a multiple of 128; tiles chosen to divide it
    # exactly (padded kv columns are masked in-kernel, padded q rows trimmed).
    HWp = _round_up(HW, 128)
    tq = _pick_tile(tq, HWp)
    tk = _pick_tile(tk, HWp)
    tp = _pick_tile(tp, HWp)
    masked = HWp != HW

    wi_p = jnp.pad(wi, ((0, 0), (0, pc))).astype(jnp.bfloat16)       # (Cin, cp)
    bi_p = jnp.pad(bi, ((0, 0), (0, pc)))                            # (1, cp)
    wqkv_p = jnp.concatenate(
        [jnp.pad(w, ((0, pc), (0, pc))) for w in (wq, wk, wv)],
        axis=1).astype(jnp.bfloat16)                                 # (cp, 3cp)
    bqkv_p = jnp.concatenate(
        [jnp.pad(b, ((0, 0), (0, pc))) for b in (bq, bk, bv)], axis=1)
    gamma_s = gamma.reshape(1, 1).astype(jnp.float32)

    # NCHW -> (B, HWp, Cin) with zero-padded rows.
    x_flat = jnp.transpose(x_nchw, (0, 2, 3, 1)).reshape(B, HW, Cin)
    x_flat = jnp.pad(x_flat, ((0, 0), (0, HWp - HW), (0, 0)))

    # ---------------- pass 1: projections (once per position) ----------------
    def pconst(shape):
        return pl.BlockSpec(shape, lambda b, i: tuple(0 for _ in shape))

    x1, q, kt, v = pl.pallas_call(
        _proj_kernel,
        out_shape=(
            jax.ShapeDtypeStruct((B, HWp, cp), jnp.float32),    # x1 residual
            jax.ShapeDtypeStruct((B, HWp, cp), jnp.bfloat16),   # Q
            jax.ShapeDtypeStruct((B, cp, HWp), jnp.bfloat16),   # K^T
            jax.ShapeDtypeStruct((B, HWp, cp), jnp.bfloat16),   # V
        ),
        grid_spec=pltpu.PrefetchScalarGridSpec(
            num_scalar_prefetch=0,
            grid=(B, HWp // tp),
            in_specs=[
                pl.BlockSpec((1, tp, Cin), lambda b, i: (b, i, 0)),
                pconst((Cin, cp)), pconst((1, cp)),          # input_conv (bf16 W)
                pconst((cp, 3 * cp)), pconst((1, 3 * cp)),   # fused q|k|v conv
            ],
            out_specs=[
                pl.BlockSpec((1, tp, cp), lambda b, i: (b, i, 0)),
                pl.BlockSpec((1, tp, cp), lambda b, i: (b, i, 0)),
                pl.BlockSpec((1, cp, tp), lambda b, i: (b, 0, i)),
                pl.BlockSpec((1, tp, cp), lambda b, i: (b, i, 0)),
            ],
        ),
        compiler_params=pltpu.CompilerParams(
            dimension_semantics=("parallel", "parallel")),
    )(x_flat, wi_p, bi_p, wqkv_p, bqkv_p)

    # ------------- pass 2: flash attention + gamma * out + x1 ---------------
    kernel = functools.partial(_flash_kernel, hw_valid=HW, masked=masked)

    out_flat = pl.pallas_call(
        kernel,
        out_shape=jax.ShapeDtypeStruct((B, HWp, cp), jnp.bfloat16),
        grid_spec=pltpu.PrefetchScalarGridSpec(
            num_scalar_prefetch=0,
            grid=(B, HWp // tq, HWp // tk),
            in_specs=[
                pl.BlockSpec((1, tq, cp), lambda b, qi, ki: (b, qi, 0)),  # x1 q-rows
                pl.BlockSpec((1, tq, cp), lambda b, qi, ki: (b, qi, 0)),  # Q tile
                pl.BlockSpec((1, cp, tk), lambda b, qi, ki: (b, 0, ki)),  # K^T tile
                pl.BlockSpec((1, tk, cp), lambda b, qi, ki: (b, ki, 0)),  # V tile
                pl.BlockSpec(memory_space=pltpu.MemorySpace.SMEM),        # gamma
            ],
            out_specs=pl.BlockSpec((1, tq, cp), lambda b, qi, ki: (b, qi, 0)),
            scratch_shapes=[
                pltpu.VMEM((tq, 1), jnp.float32),    # running max
                pltpu.VMEM((tq, 1), jnp.float32),    # running sum
                pltpu.VMEM((tq, cp), jnp.float32),   # f32 output accumulator
            ],
        ),
        compiler_params=pltpu.CompilerParams(
            dimension_semantics=("parallel", "parallel", "arbitrary"),
            vmem_limit_bytes=48 * 1024 * 1024,  # safe headroom on v5e/v6e/v7x
        ),
    )(x1, q, kt, v, gamma_s)

    # (B, HWp, cp) bf16 -> (B, Cout, H, W) f32 (trim padded rows / channels).
    out = out_flat[:, :HW, :Cout].astype(jnp.float32).reshape(B, H, W, Cout)
    return jnp.transpose(out, (0, 3, 1, 2))


def make_params(key, in_dim, out_dim):
    """Deterministic synthetic parameters.

    PyTorch conv weights are (out, in, 1, 1); stored pre-transposed as (in, out)
    so a 1x1 conv is `x @ W + b`.  gamma is zero-init in the module; use a
    nonzero value here so the attention path is actually exercised.
    """
    ks = jax.random.split(key, 8)
    scale = 0.1
    wi = scale * jax.random.normal(ks[0], (in_dim, out_dim), jnp.float32)
    bi = scale * jax.random.normal(ks[1], (1, out_dim), jnp.float32)
    wq = scale * jax.random.normal(ks[2], (out_dim, out_dim), jnp.float32)
    bq = scale * jax.random.normal(ks[3], (1, out_dim), jnp.float32)
    wk = scale * jax.random.normal(ks[4], (out_dim, out_dim), jnp.float32)
    bk = scale * jax.random.normal(ks[5], (1, out_dim), jnp.float32)
    wv = scale * jax.random.normal(ks[6], (out_dim, out_dim), jnp.float32)
    bv = scale * jax.random.normal(ks[7], (1, out_dim), jnp.float32)
    gamma = jnp.full((1, 1), 0.5, jnp.float32)
    return (wi, bi, wq, bq, wk, bk, wv, bv, gamma)


def eac_module_reference(x_nchw, params):
    """Pure-JAX f32 reference mirroring the PyTorch forward exactly."""
    wi, bi, wq, bq, wk, bk, wv, bv, gamma = params
    B, Cin, H, W = x_nchw.shape
    xf = jnp.transpose(x_nchw, (0, 2, 3, 1)).reshape(B, H * W, Cin)
    x1 = xf @ wi + bi
    q = x1 @ wq + bq
    k = x1 @ wk + bk
    v = x1 @ wv + bv
    energy = jnp.einsum("bnc,bmc->bnm", q, k)
    att = jax.nn.softmax(energy, axis=-1)
    out = jnp.einsum("bnm,bmc->bnc", att, v)
    out = gamma[0, 0] * out + x1
    C = wi.shape[1]
    return jnp.transpose(out.reshape(B, H, W, C), (0, 3, 1, 2))


if __name__ == "__main__":
    B, Cin, Cout, H, W = 2, 4, 8, 16, 16
    key = jax.random.PRNGKey(0)
    kx, kp = jax.random.split(key)
    x = jax.random.normal(kx, (B, Cin, H, W), jnp.float32)
    params = make_params(kp, Cin, Cout)

    out = jax.block_until_ready(eac_module_forward(x, params))
    ref = jax.block_until_ready(eac_module_reference(x, params))

    assert out.shape == (B, Cout, H, W)
    # bf16 MXU operands / bf16 output store (f32 accumulation) => loose tol.
    err = float(jnp.max(jnp.abs(out - ref)))
    assert err < 2e-2, f"mismatch vs. reference: max abs err {err}"
    print("KERNEL_OK")
</pallas_src>

<mosaic_0001>
module attributes {stable_mosaic.version = 11 : i64} {
  func.func @_proj_kernel(%arg0: i32, %arg1: i32, %arg2: memref<1x256x4xf32, #tpu.memory_space<vmem>>, %arg3: memref<4x128xbf16, #tpu.memory_space<vmem>>, %arg4: memref<1x128xf32, #tpu.memory_space<vmem>>, %arg5: memref<128x384xbf16, #tpu.memory_space<vmem>>, %arg6: memref<1x384xf32, #tpu.memory_space<vmem>>, %arg7: memref<1x256x128xf32, #tpu.memory_space<vmem>>, %arg8: memref<1x256x128xbf16, #tpu.memory_space<vmem>>, %arg9: memref<1x128x256xbf16, #tpu.memory_space<vmem>>, %arg10: memref<1x256x128xbf16, #tpu.memory_space<vmem>>) attributes {dimension_semantics = [#tpu.dimension_semantics<parallel>, #tpu.dimension_semantics<parallel>], iteration_bounds = array<i64: 2, 1>, scalar_prefetch = 0 : i64, scratch_operands = 0 : i64, tpu.core_type = #tpu.core_type<tc>, window_params = [{transform_indices = @transform_0, window_bounds = array<i64: 1, 256, 4>}, {pipeline_mode = #tpu.pipeline_mode<synchronous>, transform_indices = @transform_1, window_bounds = array<i64: 4, 128>}, {pipeline_mode = #tpu.pipeline_mode<synchronous>, transform_indices = @transform_2, window_bounds = array<i64: 1, 128>}, {pipeline_mode = #tpu.pipeline_mode<synchronous>, transform_indices = @transform_3, window_bounds = array<i64: 128, 384>}, {pipeline_mode = #tpu.pipeline_mode<synchronous>, transform_indices = @transform_4, window_bounds = array<i64: 1, 384>}, {transform_indices = @transform_5, window_bounds = array<i64: 1, 256, 128>}, {transform_indices = @transform_6, window_bounds = array<i64: 1, 256, 128>}, {transform_indices = @transform_7, window_bounds = array<i64: 1, 128, 256>}, {transform_indices = @transform_8, window_bounds = array<i64: 1, 256, 128>}]} {
    %c0 = arith.constant 0 : index
    %c0_0 = arith.constant 0 : index
    %c0_1 = arith.constant 0 : index
    %0 = vector.load %arg2[%c0, %c0_0, %c0_1] : memref<1x256x4xf32, #tpu.memory_space<vmem>>, vector<1x256x4xf32>
    %1 = vector.shape_cast %0 : vector<1x256x4xf32> to vector<256x4xf32>
    %2 = arith.truncf %1 : vector<256x4xf32> to vector<256x4xbf16>
    %c0_2 = arith.constant 0 : index
    %c0_3 = arith.constant 0 : index
    %3 = vector.load %arg3[%c0_2, %c0_3] : memref<4x128xbf16, #tpu.memory_space<vmem>>, vector<4x128xbf16>
    %cst = arith.constant dense<0.000000e+00> : vector<256x128xf32>
    %4 = tpu.matmul %2, %3, %cst {dimension_numbers = #tpu.dot_dimension_numbers<[1], [0], [0], [1], [0, 0, 1, 1], [], []>} : vector<256x4xbf16>, vector<4x128xbf16>, vector<256x128xf32> -> vector<256x128xf32>
    %c0_4 = arith.constant 0 : index
    %c0_5 = arith.constant 0 : index
    %5 = vector.load %arg4[%c0_4, %c0_5] : memref<1x128xf32, #tpu.memory_space<vmem>>, vector<1x128xf32>
    %6 = vector.broadcast %5 : vector<1x128xf32> to vector<256x128xf32>
    %7 = arith.addf %4, %6 : vector<256x128xf32>
    %c0_6 = arith.constant 0 : index
    %c0_7 = arith.constant 0 : index
    %c0_8 = arith.constant 0 : index
    %8 = vector.load %arg7[%c0_6, %c0_7, %c0_8] : memref<1x256x128xf32, #tpu.memory_space<vmem>>, vector<1x256x128xf32>
    %9 = vector.shape_cast %8 : vector<1x256x128xf32> to vector<256x128xf32>
    %10 = vector.shape_cast %7 : vector<256x128xf32> to vector<1x256x128xf32>
    tpu.vector_store %arg7[%c0_6, %c0_7, %c0_8], %10 {strides = array<i32>} : memref<1x256x128xf32, #tpu.memory_space<vmem>>, vector<1x256x128xf32>,
    %11 = arith.truncf %7 : vector<256x128xf32> to vector<256x128xbf16>
    %c0_9 = arith.constant 0 : index
    %c0_10 = arith.constant 0 : index
    %12 = vector.load %arg5[%c0_9, %c0_10] : memref<128x384xbf16, #tpu.memory_space<vmem>>, vector<128x384xbf16>
    %cst_11 = arith.constant dense<0.000000e+00> : vector<256x384xf32>
    %13 = tpu.matmul %11, %12, %cst_11 {dimension_numbers = #tpu.dot_dimension_numbers<[1], [0], [0], [1], [0, 0, 1, 1], [], []>} : vector<256x128xbf16>, vector<128x384xbf16>, vector<256x384xf32> -> vector<256x384xf32>
    %c0_12 = arith.constant 0 : index
    %c0_13 = arith.constant 0 : index
    %14 = vector.load %arg6[%c0_12, %c0_13] : memref<1x384xf32, #tpu.memory_space<vmem>>, vector<1x384xf32>
    %15 = vector.broadcast %14 : vector<1x384xf32> to vector<256x384xf32>
    %16 = arith.addf %13, %15 : vector<256x384xf32>
    %17 = vector.extract_strided_slice %16 {offsets = [0, 0], sizes = [256, 128], strides = [1, 1]} : vector<256x384xf32> to vector<256x128xf32>
    %18 = arith.truncf %17 : vector<256x128xf32> to vector<256x128xbf16>
    %c0_14 = arith.constant 0 : index
    %c0_15 = arith.constant 0 : index
    %c0_16 = arith.constant 0 : index
    %19 = vector.load %arg8[%c0_14, %c0_15, %c0_16] : memref<1x256x128xbf16, #tpu.memory_space<vmem>>, vector<1x256x128xbf16>
    %20 = vector.shape_cast %19 : vector<1x256x128xbf16> to vector<256x128xbf16>
    %21 = vector.shape_cast %18 : vector<256x128xbf16> to vector<1x256x128xbf16>
    tpu.vector_store %arg8[%c0_14, %c0_15, %c0_16], %21 {strides = array<i32>} : memref<1x256x128xbf16, #tpu.memory_space<vmem>>, vector<1x256x128xbf16>,
    %22 = vector.extract_strided_slice %16 {offsets = [0, 128], sizes = [256, 128], strides = [1, 1]} : vector<256x384xf32> to vector<256x128xf32>
    %23 = tpu.transpose %22, [1, 0] : vector<256x128xf32> -> vector<128x256xf32>
    %24 = arith.truncf %23 : vector<128x256xf32> to vector<128x256xbf16>
    %c0_17 = arith.constant 0 : index
    %c0_18 = arith.constant 0 : index
    %c0_19 = arith.constant 0 : index
    %25 = vector.load %arg9[%c0_17, %c0_18, %c0_19] : memref<1x128x256xbf16, #tpu.memory_space<vmem>>, vector<1x128x256xbf16>
    %26 = vector.shape_cast %25 : vector<1x128x256xbf16> to vector<128x256xbf16>
    %27 = vector.shape_cast %24 : vector<128x256xbf16> to vector<1x128x256xbf16>
    tpu.vector_store %arg9[%c0_17, %c0_18, %c0_19], %27 {strides = array<i32>} : memref<1x128x256xbf16, #tpu.memory_space<vmem>>, vector<1x128x256xbf16>,
    %28 = vector.extract_strided_slice %16 {offsets = [0, 256], sizes = [256, 128], strides = [1, 1]} : vector<256x384xf32> to vector<256x128xf32>
    %29 = arith.truncf %28 : vector<256x128xf32> to vector<256x128xbf16>
    %c0_20 = arith.constant 0 : index
    %c0_21 = arith.constant 0 : index
    %c0_22 = arith.constant 0 : index
    %30 = vector.load %arg10[%c0_20, %c0_21, %c0_22] : memref<1x256x128xbf16, #tpu.memory_space<vmem>>, vector<1x256x128xbf16>
    %31 = vector.shape_cast %30 : vector<1x256x128xbf16> to vector<256x128xbf16>
    %32 = vector.shape_cast %29 : vector<256x128xbf16> to vector<1x256x128xbf16>
    tpu.vector_store %arg10[%c0_20, %c0_21, %c0_22], %32 {strides = array<i32>} : memref<1x256x128xbf16, #tpu.memory_space<vmem>>, vector<1x256x128xbf16>,
    return
  }
  func.func @transform_0(%arg0: i32, %arg1: i32) -> (i32, i32, i32) {
    %c0_i32 = arith.constant 0 : i32
    %c0_i32_0 = arith.constant 0 : i32
    return %arg0, %arg1, %c0_i32 : i32, i32, i32
  }
  func.func @transform_1(%arg0: i32, %arg1: i32) -> (i32, i32) {
    %c0_i32 = arith.constant 0 : i32
    %c0_i32_0 = arith.constant 0 : i32
    %c0_i32_1 = arith.constant 0 : i32
    return %c0_i32, %c0_i32_0 : i32, i32
  }
  func.func @transform_2(%arg0: i32, %arg1: i32) -> (i32, i32) {
    %c0_i32 = arith.constant 0 : i32
    %c0_i32_0 = arith.constant 0 : i32
    %c0_i32_1 = arith.constant 0 : i32
    return %c0_i32, %c0_i32_0 : i32, i32
  }
  func.func @transform_3(%arg0: i32, %arg1: i32) -> (i32, i32) {
    %c0_i32 = arith.constant 0 : i32
    %c0_i32_0 = arith.constant 0 : i32
    %c0_i32_1 = arith.constant 0 : i32
    return %c0_i32, %c0_i32_0 : i32, i32
  }
  func.func @transform_4(%arg0: i32, %arg1: i32) -> (i32, i32) {
    %c0_i32 = arith.constant 0 : i32
    %c0_i32_0 = arith.constant 0 : i32
    %c0_i32_1 = arith.constant 0 : i32
    return %c0_i32, %c0_i32_0 : i32, i32
  }
  func.func @transform_5(%arg0: i32, %arg1: i32) -> (i32, i32, i32) {
    %c0_i32 = arith.constant 0 : i32
    %c0_i32_0 = arith.constant 0 : i32
    return %arg0, %arg1, %c0_i32 : i32, i32, i32
  }
  func.func @transform_6(%arg0: i32, %arg1: i32) -> (i32, i32, i32) {
    %c0_i32 = arith.constant 0 : i32
    %c0_i32_0 = arith.constant 0 : i32
    return %arg0, %arg1, %c0_i32 : i32, i32, i32
  }
  func.func @transform_7(%arg0: i32, %arg1: i32) -> (i32, i32, i32) {
    %c0_i32 = arith.constant 0 : i32
    %c0_i32_0 = arith.constant 0 : i32
    return %arg0, %c0_i32, %arg1 : i32, i32, i32
  }
  func.func @transform_8(%arg0: i32, %arg1: i32) -> (i32, i32, i32) {
    %c0_i32 = arith.constant 0 : i32
    %c0_i32_0 = arith.constant 0 : i32
    return %arg0, %arg1, %c0_i32 : i32, i32, i32
  }
}

</mosaic_0001>

<llo_original>
// kernel: tpu_custom_call.1
$region0: #{tpu_custom_call.1}
  #allocation0 [shape = 'u32[]', space=smem, size = 0x4, offset = 0x4, fixed_abs, tag = 'smem constant byte address 0x4 - core index']
  #allocation1 [shape = 'u32[144,128]{1,0:T(1,128)}', space=vmem, size = 0x12000, scoped, tag = 'internal scratch']
  %s0 = inlined_call_operand.vmem [shape: f32[2,256,4], index: 0, kind: input, shape index: {}]
  %s1 = inlined_call_operand.vmem [shape: bf16[4,128], index: 1, kind: input, shape index: {}]
  %s2 = inlined_call_operand.vmem [shape: f32[1,128], index: 2, kind: input, shape index: {}]
  %s3 = inlined_call_operand.vmem [shape: bf16[128,384], index: 3, kind: input, shape index: {}]
  %s4 = inlined_call_operand.vmem [shape: f32[1,384], index: 4, kind: input, shape index: {}]
  %s5 = inlined_call_operand.hbm [shape: f32[2,256,128], index: 5, kind: output, shape index: {0}]
  %s6 = inlined_call_operand.hbm [shape: bf16[2,256,128], index: 6, kind: output, shape index: {1}]
  %s7 = inlined_call_operand.hbm [shape: bf16[2,128,256], index: 7, kind: output, shape index: {2}]
  %s8 = inlined_call_operand.hbm [shape: bf16[2,256,128], index: 8, kind: output, shape index: {3}]
  %9 = xla_tuple %s5, %s6, %s7, %s8
  %s10 = sld [smem:[#allocation0]]
  $region77: #{tpu_custom_call.1} parent=0
    _
  %s12 = ssub.s32 1, %s10
  %s13 = scalar_select 0, %s12, %s10
  $region1: #{tpu_custom_call.1} parent=0
    #allocation2 [shape = 'u8[262144]{0}', space=vmem, size = 0x40000, scoped, tag = 'output window, operand 0']
    #allocation3 [shape = 's32[2]{0}', space=sflag, size = 0x8, scoped, tag = 'scoped memory for tpu_custom_call.1']
    #allocation4 [shape = 'u8[131072]{0}', space=vmem, size = 0x20000, scoped, tag = 'output window, operand 1']
    #allocation5 [shape = 's32[2]{0}', space=sflag, size = 0x8, scoped, tag = 'scoped memory for tpu_custom_call.1']
    #allocation6 [shape = 'u8[131072]{0}', space=vmem, size = 0x20000, scoped, tag = 'output window, operand 2']
    #allocation7 [shape = 'u8[131072]{0}', space=vmem, size = 0x20000, scoped, tag = 'output window, operand 3']
    #allocation8 [shape = 's32[2]{0}', space=sflag, size = 0x8, scoped, tag = 'scoped memory for tpu_custom_call.1']
    %14 = vsyncpa [#allocation3], 0
    %s15 = scalar_lea.sflag [#allocation3], 1
    %16 = vsyncpa %s15, 0
    %17 = vsyncpa [#allocation5], 0
    %s18 = scalar_lea.sflag [#allocation5], 1
    %19 = vsyncpa %s18, 0
    %20 = vsyncpa [#allocation8], 0
    %s21 = scalar_lea.sflag [#allocation8], 1
    %22 = vsyncpa %s21, 0
    loop: start=0, step=1, limit=4
    $region2: #{tpu_custom_call.1} parent=1 // loop_pre_header
      _
    $region3: #{tpu_custom_call.1} parent=1 // loop_header
      %s24 = sphi 0, %s28
      %p25 = scmp.ge.s32.totalorder %s24, 4
      %s31 = sphi 0, %s43
      %s32 = sphi 0, %s39
      %s33 = sphi 0, %s31
      %s34 = sphi 0, %s32
      %s35 = sphi 0, %s33
      %s36 = sphi 0, %s34
      %s48 = sphi 0, %s50
      %s51 = sphi 0, %s48
      %s52 = sphi 0, %s51
      %s68 = sphi 0, %s52
      %s72 = sphi 0, %s72
      %s74 = sphi 0, %s72
      %s75 = sphi 0, %s74
      %s89 = sphi 0, %s75
      %s93 = sphi 0, %s93
      %s95 = sphi 0, %s93
      %s96 = sphi 0, %s95
      %s110 = sphi 0, %s96
      %s114 = sphi 0, %s114
      %s116 = sphi 0, %s114
      %s117 = sphi 0, %s116
      %s131 = sphi 0, %s117
      %s135 = sphi 0, %s135
      %s137 = sphi 0, %s135
      %s138 = sphi 0, %s137
      %s152 = sphi 0, %s138
      %s160 = sphi 0, %s162
      %s163 = sphi 0, %s160
      %s164 = sphi 0, %s163
      %s180 = sphi 0, %s164
      %s188 = sphi 0, %s190
      %s191 = sphi 0, %s188
      %s192 = sphi 0, %s191
      %s208 = sphi 0, %s192
      %s216 = sphi 0, %s218
      %s219 = sphi 0, %s216
      %s220 = sphi 0, %s219
      %s236 = sphi 0, %s220
      %s244 = sphi 0, %s246
      %s247 = sphi 0, %s244
      %s248 = sphi 0, %s247
      %s264 = sphi 0, %s248
    $region4: #{tpu_custom_call.1} parent=1 // loop_header_branch
      %27 = sbr.rel (%p25) target = $region8
    $region5: #{tpu_custom_call.1} parent=1 // loop_body
      %s29 = ssub.s32 %s24, 1
      %s30 = ssub.s32 %s24, 2
      %s37 = sadd.s32 1, %s32
      %p38 = scmp.ge.s32.totalorder %s37, 1
      %s39 = scalar_select %p38, 0, %s37
      %s40 = sadd.s32 1, %s31
      %s41 = scalar_select %p38, %s40, %s31
      %p42 = scmp.ge.s32.totalorder %s41, 2
      %s43 = scalar_select %p42, 0, %s41
      %s44 = ssub.s32 %s31, %s43
      %s45 = ssub.s32 %s32, %s39
      %s46 = sor.u32 %s44, %s45
      %p47 = scmp.eq.s32.totalorder %s46, 0
      %s49 = sadd.s32 %s48, 1
      %s50 = scalar_select %p47, %s48, %s49
      %p53 = pneg %p47
      %p54 = scmp.eq.s32.totalorder %s24, 1
      %p55 = por %p53, %p54
      %p56 = scmp.ne.s32.totalorder %s48, %s51
      %p57 = scmp.eq.s32.totalorder %s24, 0
      %p58 = por %p56, %p57
      %p59 = scmp.ne.s32.totalorder %s48, %s51
      %p60 = scmp.eq.s32.totalorder %s29, 1
      %p61 = por %p59, %p60
      %p62 = scmp.ne.s32.totalorder %s51, %s52
      %p63 = scmp.eq.s32.totalorder %s29, 0
      %p64 = por %p62, %p63
      %p65 = scmp.ne.s32.totalorder %s51, %s52
      %p66 = scmp.eq.s32.totalorder %s30, 1
      %p67 = por %p65, %p66
      %p69 = scmp.ne.s32.totalorder %s52, %s68
      %p70 = scmp.eq.s32.totalorder %s30, 0
      %p71 = por %p69, %p70
      %s73 = sadd.s32 %s72, 1
      %p76 = scmp.eq.s32.totalorder %s24, 1
      %p77 = scmp.ne.s32.totalorder %s72, %s74
      %p78 = scmp.eq.s32.totalorder %s24, 0
      %p79 = por %p77, %p78
      %p80 = scmp.ne.s32.totalorder %s72, %s74
      %p81 = scmp.eq.s32.totalorder %s29, 1
      %p82 = por %p80, %p81
      %p83 = scmp.ne.s32.totalorder %s74, %s75
      %p84 = scmp.eq.s32.totalorder %s29, 0
      %p85 = por %p83, %p84
      %p86 = scmp.ne.s32.totalorder %s74, %s75
      %p87 = scmp.eq.s32.totalorder %s30, 1
      %p88 = por %p86, %p87
      %p90 = scmp.ne.s32.totalorder %s75, %s89
      %p91 = scmp.eq.s32.totalorder %s30, 0
      %p92 = por %p90, %p91
      %s94 = sadd.s32 %s93, 1
      %p97 = scmp.eq.s32.totalorder %s24, 1
      %p98 = scmp.ne.s32.totalorder %s93, %s95
      %p99 = scmp.eq.s32.totalorder %s24, 0
      %p100 = por %p98, %p99
      %p101 = scmp.ne.s32.totalorder %s93, %s95
      %p102 = scmp.eq.s32.totalorder %s29, 1
      %p103 = por %p101, %p102
      %p104 = scmp.ne.s32.totalorder %s95, %s96
      %p105 = scmp.eq.s32.totalorder %s29, 0
      %p106 = por %p104, %p105
      %p107 = scmp.ne.s32.totalorder %s95, %s96
      %p108 = scmp.eq.s32.totalorder %s30, 1
      %p109 = por %p107, %p108
      %p111 = scmp.ne.s32.totalorder %s96, %s110
      %p112 = scmp.eq.s32.totalorder %s30, 0
      %p113 = por %p111, %p112
      %s115 = sadd.s32 %s114, 1
      %p118 = scmp.eq.s32.totalorder %s24, 1
      %p119 = scmp.ne.s32.totalorder %s114, %s116
      %p120 = scmp.eq.s32.totalorder %s24, 0
      %p121 = por %p119, %p120
      %p122 = scmp.ne.s32.totalorder %s114, %s116
      %p123 = scmp.eq.s32.totalorder %s29, 1
      %p124 = por %p122, %p123
      %p125 = scmp.ne.s32.totalorder %s116, %s117
      %p126 = scmp.eq.s32.totalorder %s29, 0
      %p127 = por %p125, %p126
      %p128 = scmp.ne.s32.totalorder %s116, %s117
      %p129 = scmp.eq.s32.totalorder %s30, 1
      %p130 = por %p128, %p129
      %p132 = scmp.ne.s32.totalorder %s117, %s131
      %p133 = scmp.eq.s32.totalorder %s30, 0
      %p134 = por %p132, %p133
      %s136 = sadd.s32 %s135, 1
      %p139 = scmp.eq.s32.totalorder %s24, 1
      %p140 = scmp.ne.s32.totalorder %s135, %s137
      %p141 = scmp.eq.s32.totalorder %s24, 0
      %p142 = por %p140, %p141
      %p143 = scmp.ne.s32.totalorder %s135, %s137
      %p144 = scmp.eq.s32.totalorder %s29, 1
      %p145 = por %p143, %p144
      %p146 = scmp.ne.s32.totalorder %s137, %s138
      %p147 = scmp.eq.s32.totalorder %s29, 0
      %p148 = por %p146, %p147
      %p149 = scmp.ne.s32.totalorder %s137, %s138
      %p150 = scmp.eq.s32.totalorder %s30, 1
      %p151 = por %p149, %p150
      %p153 = scmp.ne.s32.totalorder %s138, %s152
      %p154 = scmp.eq.s32.totalorder %s30, 0
      %p155 = por %p153, %p154
      %s156 = ssub.s32 %s31, %s43
      %s157 = ssub.s32 %s32, %s39
      %s158 = sor.u32 %s156, %s157
      %p159 = scmp.eq.s32.totalorder %s158, 0
      %s161 = sadd.s32 %s160, 1
      %s162 = scalar_select %p159, %s160, %s161
      %p165 = pneg %p159
      %p166 = scmp.eq.s32.totalorder %s24, 1
      %p167 = por %p165, %p166
      %p168 = scmp.ne.s32.totalorder %s160, %s163
      %p169 = scmp.eq.s32.totalorder %s24, 0
      %p170 = por %p168, %p169
      %p171 = scmp.ne.s32.totalorder %s160, %s163
      %p172 = scmp.eq.s32.totalorder %s29, 1
      %p173 = por %p171, %p172
      %p174 = scmp.ne.s32.totalorder %s163, %s164
      %p175 = scmp.eq.s32.totalorder %s29, 0
      %p176 = por %p174, %p175
      %p177 = scmp.ne.s32.totalorder %s163, %s164
      %p178 = scmp.eq.s32.totalorder %s30, 1
      %p179 = por %p177, %p178
      %p181 = scmp.ne.s32.totalorder %s164, %s180
      %p182 = scmp.eq.s32.totalorder %s30, 0
      %p183 = por %p181, %p182
      %s184 = ssub.s32 %s31, %s43
      %s185 = ssub.s32 %s32, %s39
      %s186 = sor.u32 %s184, %s185
      %p187 = scmp.eq.s32.totalorder %s186, 0
      %s189 = sadd.s32 %s188, 1
      %s190 = scalar_select %p187, %s188, %s189
      %p193 = pneg %p187
      %p194 = scmp.eq.s32.totalorder %s24, 1
      %p195 = por %p193, %p194
      %p196 = scmp.ne.s32.totalorder %s188, %s191
      %p197 = scmp.eq.s32.totalorder %s24, 0
      %p198 = por %p196, %p197
      %p199 = scmp.ne.s32.totalorder %s188, %s191
      %p200 = scmp.eq.s32.totalorder %s29, 1
      %p201 = por %p199, %p200
      %p202 = scmp.ne.s32.totalorder %s191, %s192
      %p203 = scmp.eq.s32.totalorder %s29, 0
      %p204 = por %p202, %p203
      %p205 = scmp.ne.s32.totalorder %s191, %s192
      %p206 = scmp.eq.s32.totalorder %s30, 1
      %p207 = por %p205, %p206
      %p209 = scmp.ne.s32.totalorder %s192, %s208
      %p210 = scmp.eq.s32.totalorder %s30, 0
      %p211 = por %p209, %p210
      %s212 = ssub.s32 %s31, %s43
      %s213 = ssub.s32 %s32, %s39
      %s214 = sor.u32 %s212, %s213
      %p215 = scmp.eq.s32.totalorder %s214, 0
      %s217 = sadd.s32 %s216, 1
      %s218 = scalar_select %p215, %s216, %s217
      %p221 = pneg %p215
      %p222 = scmp.eq.s32.totalorder %s24, 1
      %p223 = por %p221, %p222
      %p224 = scmp.ne.s32.totalorder %s216, %s219
      %p225 = scmp.eq.s32.totalorder %s24, 0
      %p226 = por %p224, %p225
      %p227 = scmp.ne.s32.totalorder %s216, %s219
      %p228 = scmp.eq.s32.totalorder %s29, 1
      %p229 = por %p227, %p228
      %p230 = scmp.ne.s32.totalorder %s219, %s220
      %p231 = scmp.eq.s32.totalorder %s29, 0
      %p232 = por %p230, %p231
      %p233 = scmp.ne.s32.totalorder %s219, %s220
      %p234 = scmp.eq.s32.totalorder %s30, 1
      %p235 = por %p233, %p234
      %p237 = scmp.ne.s32.totalorder %s220, %s236
      %p238 = scmp.eq.s32.totalorder %s30, 0
      %p239 = por %p237, %p238
      %s240 = ssub.s32 %s31, %s43
      %s241 = ssub.s32 %s32, %s39
      %s242 = sor.u32 %s240, %s241
      %p243 = scmp.eq.s32.totalorder %s242, 0
      %s245 = sadd.s32 %s244, 1
      %s246 = scalar_select %p243, %s244, %s245
      %p249 = pneg %p243
      %p250 = scmp.eq.s32.totalorder %s24, 1
      %p251 = por %p249, %p250
      %p252 = scmp.ne.s32.totalorder %s244, %s247
      %p253 = scmp.eq.s32.totalorder %s24, 0
      %p254 = por %p252, %p253
      %p255 = scmp.ne.s32.totalorder %s244, %s247
      %p256 = scmp.eq.s32.totalorder %s29, 1
      %p257 = por %p255, %p256
      %p258 = scmp.ne.s32.totalorder %s247, %s248
      %p259 = scmp.eq.s32.totalorder %s29, 0
      %p260 = por %p258, %p259
      %p261 = scmp.ne.s32.totalorder %s247, %s248
      %p262 = scmp.eq.s32.totalorder %s30, 1
      %p263 = por %p261, %p262
      %p265 = scmp.ne.s32.totalorder %s248, %s264
      %p266 = scmp.eq.s32.totalorder %s30, 0
      %p267 = por %p265, %p266
      %p268 = scmp.le.s32.totalorder 1, %s24
      %p269 = scmp.lt.s32.totalorder %s24, 3
      %p270 = pnand %p268, %p269
      %p271 = pneg %p270
      // Predicated region
      $region9: #{tpu_custom_call.1} parent=5 // pred_check
        _
      $region10: #{tpu_custom_call.1} parent=5 // pred_check_branch
        %273 = sbr.rel (%p270) target = $region12
      $region11: #{tpu_custom_call.1} parent=5 // pred_region
        %s274 = ssub.s32 %s24, 1
        // Predicated region
        $region13: #{tpu_custom_call.1} parent=11 // pred_check
          %p275 = pneg %p85
        $region14: #{tpu_custom_call.1} parent=11 // pred_check_branch
          %277 = sbr.rel (%p275) target = $region16
        $region15: #{tpu_custom_call.1} parent=11 // pred_region
          _
        $region16: #{tpu_custom_call.1} parent=11 // pred_fallthru
          _
        // Predicated region
        $region17: #{tpu_custom_call.1} parent=11 // pred_check
          %p278 = pneg %p106
        $region18: #{tpu_custom_call.1} parent=11 // pred_check_branch
          %280 = sbr.rel (%p278) target = $region20
        $region19: #{tpu_custom_call.1} parent=11 // pred_region
          _
        $region20: #{tpu_custom_call.1} parent=11 // pred_fallthru
          _
        // Predicated region
        $region21: #{tpu_custom_call.1} parent=11 // pred_check
          %p281 = pneg %p127
        $region22: #{tpu_custom_call.1} parent=11 // pred_check_branch
          %283 = sbr.rel (%p281) target = $region24
        $region23: #{tpu_custom_call.1} parent=11 // pred_region
          _
        $region24: #{tpu_custom_call.1} parent=11 // pred_fallthru
          _
        // Predicated region
        $region25: #{tpu_custom_call.1} parent=11 // pred_check
          %p284 = pneg %p148
        $region26: #{tpu_custom_call.1} parent=11 // pred_check_branch
          %286 = sbr.rel (%p284) target = $region28
        $region27: #{tpu_custom_call.1} parent=11 // pred_region
          _
        $region28: #{tpu_custom_call.1} parent=11 // pred_fallthru
          _
      $region12: #{tpu_custom_call.1} parent=5 // pred_fallthru
        _
      %p287 = scmp.lt.s32.totalorder %s24, 2
      // Predicated region
      $region29: #{tpu_custom_call.1} parent=5 // pred_check
        %p288 = pneg %p287
      $region30: #{tpu_custom_call.1} parent=5 // pred_check_branch
        %290 = sbr.rel (%p288) target = $region32
      $region31: #{tpu_custom_call.1} parent=5 // pred_region
        // Predicated region
        $region33: #{tpu_custom_call.1} parent=31 // pred_check
          %p291 = pneg %p58
        $region34: #{tpu_custom_call.1} parent=31 // pred_check_branch
          %293 = sbr.rel (%p291) target = $region36
        $region35: #{tpu_custom_call.1} parent=31 // pred_region
          %s294 = smul.u32 32, %s32
          %p295 = scmp.lt.s32.totalorder %s31, 1
          %s296 = scalar_select %p295, %s31, 1
          %p297 = scmp.lt.s32.totalorder %s294, 31
          %s298 = scalar_select %p297, %s294, 31
          %s299 = smul.addr %s296, 32
          %s300 = sadd.s32 %s298, %s299
          %s301 = smul.addr %s300, 8
          %s302 = scalar_lea.vmem %s0, %s301
          %s303 = smul.u32 32, %s32
        $region36: #{tpu_custom_call.1} parent=31 // pred_fallthru
          _
      $region32: #{tpu_custom_call.1} parent=5 // pred_fallthru
        _
      %p304 = scmp.le.s32.totalorder 1, %s24
      %p305 = scmp.lt.s32.totalorder %s24, 3
      %p306 = pnand %p304, %p305
      %p307 = pneg %p306
      // Predicated region
      $region37: #{tpu_custom_call.1} parent=5 // pred_check
        _
      $region38: #{tpu_custom_call.1} parent=5 // pred_check_branch
        %309 = sbr.rel (%p306) target = $region40
      $region39: #{tpu_custom_call.1} parent=5 // pred_region
        %s310 = ssub.s32 %s24, 1
        %s311 = smul.u32 32, %s34
        %p312 = scmp.lt.s32.totalorder %s33, 1
        %s313 = scalar_select %p312, %s33, 1
        %p314 = scmp.lt.s32.totalorder %s311, 31
        %s315 = scalar_select %p314, %s311, 31
        %s316 = smul.addr %s313, 32
        %s317 = sadd.s32 %s315, %s316
        %s318 = smul.addr %s317, 8
        %s319 = scalar_lea.vmem %s0, %s318
        %p320 = pneg %p64
        %p321 = pneg %p61
        %p322 = pneg %p85
        %p323 = pneg %p82
        %p324 = pneg %p106
        %p325 = pneg %p103
        %p326 = pneg %p127
        %p327 = pneg %p124
        %p328 = pneg %p148
        %p329 = pneg %p145
        %p330 = pneg %p176
        %p331 = pneg %p173
        %s332 = sand.u32 %s163, 1
        %s333 = scalar_lea.sflag [#allocation3], %s332
        %s334 = sand.u32 %s163, 1
        %s335 = smul.addr %s334, 256
        %s336 = scalar_lea.vmem [#allocation2], %s335
        %p337 = pneg %p204
        %p338 = pneg %p201
        %s339 = sand.u32 %s29, 1
        %s340 = scalar_lea.sflag [#allocation5], %s339
        %s341 = sand.u32 %s191, 1
        %s342 = smul.addr %s341, 128
        %s343 = scalar_lea.vmem [#allocation4], %s342
        %p344 = pneg %p232
        %p345 = pneg %p229
        %s346 = sand.u32 %s29, 1
        %s347 = scalar_lea.sflag [#allocation5], %s346
        %s348 = sand.u32 %s219, 1
        %s349 = smul.addr %s348, 128
        %s350 = scalar_lea.vmem [#allocation6], %s349
        %p351 = pneg %p260
        %p352 = pneg %p257
        %s353 = sand.u32 %s247, 1
        %s354 = scalar_lea.sflag [#allocation8], %s353
        %s355 = sand.u32 %s247, 1
        %s356 = smul.addr %s355, 128
        %s357 = scalar_lea.vmem [#allocation7], %s356
        %s358 = smul.u32 32, %s34
        %p359 = scmp.lt.s32.totalorder %s33, 1
        %s360 = scalar_select %p359, %s33, 1
        %p361 = scmp.lt.s32.totalorder %s358, 31
        %s362 = scalar_select %p361, %s358, 31
        %s363 = smul.addr %s360, 32
        %s364 = sadd.s32 %s362, %s363
        %s365 = smul.addr %s364, 8
        %s366 = scalar_lea.vmem %s0, %s365
        %s367 = smul.u32 32, %s34
        %s368 = smul.u32 32, %s34
        %s369 = smul.u32 32, %s34
        %s370 = smul.u32 2, %s34
        %s371 = smul.u32 32, %s34
        %v373 = vld [vmem:[%s366] sm:$0xff]
        %v374 = vld [vmem:[%s366 + $0x8] sm:$0xff]
        %v375 = vld [vmem:[%s366 + $0x10] sm:$0xff]
        %v376 = vld [vmem:[%s366 + $0x18] sm:$0xff]
        %v377 = vld [vmem:[%s366 + $0x20] sm:$0xff]
        %v378 = vld [vmem:[%s366 + $0x28] sm:$0xff]
        %v379 = vld [vmem:[%s366 + $0x30] sm:$0xff]
        %v380 = vld [vmem:[%s366 + $0x38] sm:$0xff]
        %v381 = vld [vmem:[%s366 + $0x40] sm:$0xff]
        %v382 = vld [vmem:[%s366 + $0x48] sm:$0xff]
        %v383 = vld [vmem:[%s366 + $0x50] sm:$0xff]
        %v384 = vld [vmem:[%s366 + $0x58] sm:$0xff]
        %v385 = vld [vmem:[%s366 + $0x60] sm:$0xff]
        %v386 = vld [vmem:[%s366 + $0x68] sm:$0xff]
        %v387 = vld [vmem:[%s366 + $0x70] sm:$0xff]
        %v388 = vld [vmem:[%s366 + $0x78] sm:$0xff]
        %v389 = vld [vmem:[%s366 + $0x80] sm:$0xff]
        %v390 = vld [vmem:[%s366 + $0x88] sm:$0xff]
        %v391 = vld [vmem:[%s366 + $0x90] sm:$0xff]
        %v392 = vld [vmem:[%s366 + $0x98] sm:$0xff]
        %v393 = vld [vmem:[%s366 + $0xa0] sm:$0xff]
        %v394 = vld [vmem:[%s366 + $0xa8] sm:$0xff]
        %v395 = vld [vmem:[%s366 + $0xb0] sm:$0xff]
        %v396 = vld [vmem:[%s366 + $0xb8] sm:$0xff]
        %v397 = vld [vmem:[%s366 + $0xc0] sm:$0xff]
        %v398 = vld [vmem:[%s366 + $0xc8] sm:$0xff]
        %v399 = vld [vmem:[%s366 + $0xd0] sm:$0xff]
        %v400 = vld [vmem:[%s366 + $0xd8] sm:$0xff]
        %v401 = vld [vmem:[%s366 + $0xe0] sm:$0xff]
        %v402 = vld [vmem:[%s366 + $0xe8] sm:$0xff]
        %v403 = vld [vmem:[%s366 + $0xf0] sm:$0xff]
        %v404 = vld [vmem:[%s366 + $0xf8] sm:$0xff]
        %v405 = vpack.c.bf16 %v374, %v373
        %v406 = vpack.c.bf16 %v376, %v375
        %v407 = vpack.c.bf16 %v378, %v377
        %v408 = vpack.c.bf16 %v380, %v379
        %v409 = vpack.c.bf16 %v382, %v381
        %v410 = vpack.c.bf16 %v384, %v383
        %v411 = vpack.c.bf16 %v386, %v385
        %v412 = vpack.c.bf16 %v388, %v387
        %v413 = vpack.c.bf16 %v390, %v389
        %v414 = vpack.c.bf16 %v392, %v391
        %v415 = vpack.c.bf16 %v394, %v393
        %v416 = vpack.c.bf16 %v396, %v395
        %v417 = vpack.c.bf16 %v398, %v397
        %v418 = vpack.c.bf16 %v400, %v399
        %v419 = vpack.c.bf16 %v402, %v401
        %v420 = vpack.c.bf16 %v404, %v403
        %v421 = vld [vmem:[%s1] sm:$0x3]
        %v422 = vld [vmem:[%s2] sm:$0x1]
        %v424 = vlaneseq
        %v425 = vshrl.u32 %v424, 7
        %v426 = vsub.s32 0, %v425
        %v427 = vrot.slane %v422, %v426
        %vm429 = vcmask 31744
        %v431 = vsel %vm429, %v405, 0
        %v434 = vsel %vm429, %v406, 0
        %v437 = vsel %vm429, %v407, 0
        %v440 = vsel %vm429, %v408, 0
        %v443 = vsel %vm429, %v409, 0
        %v446 = vsel %vm429, %v410, 0
        %v449 = vsel %vm429, %v411, 0
        %v452 = vsel %vm429, %v412, 0
        %v455 = vsel %vm429, %v413, 0
        %v458 = vsel %vm429, %v414, 0
        %v461 = vsel %vm429, %v415, 0
        %v464 = vsel %vm429, %v416, 0
        %v467 = vsel %vm429, %v417, 0
        %v470 = vsel %vm429, %v418, 0
        %v473 = vsel %vm429, %v419, 0
        %v476 = vsel %vm429, %v420, 0
        %vm478 = vcmask 1041408
        %v480 = vsel %vm478, %v421, 0
        %482 = vmatprep.subr.bf16.mxu0 0
        %483 = vmatpush1.bf16.msra.mxu0 %v480
        %484 = vmatprep.subr.bf16.mxu0 0
        %485 = vmatpush1.bf16.msra.mxu0 0
        %486 = vmatprep.subr.bf16.mxu0 0
        %487 = vmatpush1.bf16.msra.mxu0 0
        %488 = vmatprep.subr.bf16.mxu0 0
        %489 = vmatpush1.bf16.msra.mxu0 0
        %490 = vmatprep.subr.bf16.mxu0 0
        %491 = vmatpush1.bf16.msra.mxu0 0
        %492 = vmatprep.subr.bf16.mxu0 0
        %493 = vmatpush1.bf16.msra.mxu0 0
        %494 = vmatprep.subr.bf16.mxu0 0
        %495 = vmatpush1.bf16.msra.mxu0 0
        %496 = vmatprep.subr.bf16.mxu0 0
        %497 = vmatpush1.bf16.msra.mxu0 0
        %498 = vmatprep.subr.bf16.mxu0 0
        %499 = vmatpush1.bf16.msra.mxu0 0
        %500 = vmatprep.subr.bf16.mxu0 0
        %501 = vmatpush1.bf16.msra.mxu0 0
        %502 = vmatprep.subr.bf16.mxu0 0
        %503 = vmatpush1.bf16.msra.mxu0 0
        %504 = vmatprep.subr.bf16.mxu0 0
        %505 = vmatpush1.bf16.msra.mxu0 0
        %506 = vmatprep.subr.bf16.mxu0 0
        %507 = vmatpush1.bf16.msra.mxu0 0
        %508 = vmatprep.subr.bf16.mxu0 0
        %509 = vmatpush1.bf16.msra.mxu0 0
        %510 = vmatprep.subr.bf16.mxu0 0
        %511 = vmatpush1.bf16.msra.mxu0 0
        %512 = vmatprep.subr.bf16.mxu0 0
        %513 = vmatpush1.bf16.msra.mxu0 0
        %514 = vmatprep.mubr.bf16.mxu0 0
        %515 = vmatmul.mubr.bf16.gmra.mrb[0].mxu0 %v431
        %v516 = vpop.f32.mrb[0].mxu0
        %v517 = vadd.f32 %v427, %v516
        %v518 = vpop.f32.mrb[0].mxu0
        %v519 = vpop.f32.mrb[0].mxu0
        %v520 = vadd.f32 %v427, %v519
        %v521 = vpop.f32.mrb[0].mxu0
        %522 = vmatprep.mubr.bf16.mxu0 0
        %523 = vmatmul.mubr.bf16.gmra.mrb[0].mxu0 %v434
        %v524 = vpop.f32.mrb[0].mxu0
        %v525 = vadd.f32 %v427, %v524
        %v526 = vpop.f32.mrb[0].mxu0
        %v527 = vpop.f32.mrb[0].mxu0
        %v528 = vadd.f32 %v427, %v527
        %v529 = vpop.f32.mrb[0].mxu0
        %530 = vmatprep.mubr.bf16.mxu0 0
        %531 = vmatmul.mubr.bf16.gmra.mrb[0].mxu0 %v437
        %v532 = vpop.f32.mrb[0].mxu0
        %v533 = vadd.f32 %v427, %v532
        %v534 = vpop.f32.mrb[0].mxu0
        %v535 = vpop.f32.mrb[0].mxu0
        %v536 = vadd.f32 %v427, %v535
        %v537 = vpop.f32.mrb[0].mxu0
        %538 = vmatprep.mubr.bf16.mxu0 0
        %539 = vmatmul.mubr.bf16.gmra.mrb[0].mxu0 %v440
        %v540 = vpop.f32.mrb[0].mxu0
        %v541 = vadd.f32 %v427, %v540
        %v542 = vpop.f32.mrb[0].mxu0
        %v543 = vpop.f32.mrb[0].mxu0
        %v544 = vadd.f32 %v427, %v543
        %v545 = vpop.f32.mrb[0].mxu0
        %546 = vmatprep.mubr.bf16.mxu0 0
        %547 = vmatmul.mubr.bf16.gmra.mrb[0].mxu0 %v443
        %v548 = vpop.f32.mrb[0].mxu0
        %v549 = vadd.f32 %v427, %v548
        %v550 = vpop.f32.mrb[0].mxu0
        %v551 = vpop.f32.mrb[0].mxu0
        %v552 = vadd.f32 %v427, %v551
        %v553 = vpop.f32.mrb[0].mxu0
        %554 = vmatprep.mubr.bf16.mxu0 0
        %555 = vmatmul.mubr.bf16.gmra.mrb[0].mxu0 %v446
        %v556 = vpop.f32.mrb[0].mxu0
        %v557 = vadd.f32 %v427, %v556
        %v558 = vpop.f32.mrb[0].mxu0
        %v559 = vpop.f32.mrb[0].mxu0
        %v560 = vadd.f32 %v427, %v559
        %v561 = vpop.f32.mrb[0].mxu0
        %562 = vmatprep.mubr.bf16.mxu0 0
        %563 = vmatmul.mubr.bf16.gmra.mrb[0].mxu0 %v449
        %v564 = vpop.f32.mrb[0].mxu0
        %v565 = vadd.f32 %v427, %v564
        %v566 = vpop.f32.mrb[0].mxu0
        %v567 = vpop.f32.mrb[0].mxu0
        %v568 = vadd.f32 %v427, %v567
        %v569 = vpop.f32.mrb[0].mxu0
        %570 = vmatprep.mubr.bf16.mxu0 0
        %571 = vmatmul.mubr.bf16.gmra.mrb[0].mxu0 %v452
        %v572 = vpop.f32.mrb[0].mxu0
        %v573 = vadd.f32 %v427, %v572
        %v574 = vpop.f32.mrb[0].mxu0
        %v575 = vpop.f32.mrb[0].mxu0
        %v576 = vadd.f32 %v427, %v575
        %v577 = vpop.f32.mrb[0].mxu0
        %578 = vmatprep.mubr.bf16.mxu0 0
        %579 = vmatmul.mubr.bf16.gmra.mrb[0].mxu0 %v455
        %v580 = vpop.f32.mrb[0].mxu0
        %v581 = vadd.f32 %v427, %v580
        %v582 = vpop.f32.mrb[0].mxu0
        %v583 = vpop.f32.mrb[0].mxu0
        %v584 = vadd.f32 %v427, %v583
        %v585 = vpop.f32.mrb[0].mxu0
        %586 = vmatprep.mubr.bf16.mxu0 0
        %587 = vmatmul.mubr.bf16.gmra.mrb[0].mxu0 %v458
        %v588 = vpop.f32.mrb[0].mxu0
        %v589 = vadd.f32 %v427, %v588
        %v590 = vpop.f32.mrb[0].mxu0
        %v591 = vpop.f32.mrb[0].mxu0
        %v592 = vadd.f32 %v427, %v591
        %v593 = vpop.f32.mrb[0].mxu0
        %594 = vmatprep.mubr.bf16.mxu0 0
        %595 = vmatmul.mubr.bf16.gmra.mrb[0].mxu0 %v461
        %v596 = vpop.f32.mrb[0].mxu0
        %v597 = vadd.f32 %v427, %v596
        %v598 = vpop.f32.mrb[0].mxu0
        %v599 = vpop.f32.mrb[0].mxu0
        %v600 = vadd.f32 %v427, %v599
        %v601 = vpop.f32.mrb[0].mxu0
        %602 = vmatprep.mubr.bf16.mxu0 0
        %603 = vmatmul.mubr.bf16.gmra.mrb[0].mxu0 %v464
        %v604 = vpop.f32.mrb[0].mxu0
        %v605 = vadd.f32 %v427, %v604
        %v606 = vpop.f32.mrb[0].mxu0
        %v607 = vpop.f32.mrb[0].mxu0
        %v608 = vadd.f32 %v427, %v607
        %v609 = vpop.f32.mrb[0].mxu0
        %610 = vmatprep.mubr.bf16.mxu0 0
        %611 = vmatmul.mubr.bf16.gmra.mrb[0].mxu0 %v467
        %v612 = vpop.f32.mrb[0].mxu0
        %v613 = vadd.f32 %v427, %v612
        %v614 = vpop.f32.mrb[0].mxu0
        %v615 = vpop.f32.mrb[0].mxu0
        %v616 = vadd.f32 %v427, %v615
        %v617 = vpop.f32.mrb[0].mxu0
        %618 = vmatprep.mubr.bf16.mxu0 0
        %619 = vmatmul.mubr.bf16.gmra.mrb[0].mxu0 %v470
        %v620 = vpop.f32.mrb[0].mxu0
        %v621 = vadd.f32 %v427, %v620
        %v622 = vpop.f32.mrb[0].mxu0
        %v623 = vpop.f32.mrb[0].mxu0
        %v624 = vadd.f32 %v427, %v623
        %v625 = vpop.f32.mrb[0].mxu0
        %626 = vmatprep.mubr.bf16.mxu0 0
        %627 = vmatmul.mubr.bf16.gmra.mrb[0].mxu0 %v473
        %v628 = vpop.f32.mrb[0].mxu0
        %v629 = vadd.f32 %v427, %v628
        %v630 = vpop.f32.mrb[0].mxu0
        %v631 = vpop.f32.mrb[0].mxu0
        %v632 = vadd.f32 %v427, %v631
        %v633 = vpop.f32.mrb[0].mxu0
        %634 = vmatprep.mubr.bf16.mxu0 0
        %635 = vmatmul.mubr.bf16.gmra.mrb[0].mxu0 %v476
        %v636 = vpop.f32.mrb[0].mxu0
        %v637 = vadd.f32 %v427, %v636
        %v638 = vpop.f32.mrb[0].mxu0
        %v639 = vpop.f32.mrb[0].mxu0
        %v640 = vadd.f32 %v427, %v639
        %v641 = vpop.f32.mrb[0].mxu0
        %642 = vdwg.mxu0
        %643 = vst [vmem:[%s336] sm:$0xff] %v517
        %644 = vst [vmem:[%s336 + $0x8] sm:$0xff] %v520
        %645 = vst [vmem:[%s336 + $0x10] sm:$0xff] %v525
        %646 = vst [vmem:[%s336 + $0x18] sm:$0xff] %v528
        %647 = vst [vmem:[%s336 + $0x20] sm:$0xff] %v533
        %648 = vst [vmem:[%s336 + $0x28] sm:$0xff] %v536
        %649 = vst [vmem:[%s336 + $0x30] sm:$0xff] %v541
        %650 = vst [vmem:[%s336 + $0x38] sm:$0xff] %v544
        %651 = vst [vmem:[%s336 + $0x40] sm:$0xff] %v549
        %652 = vst [vmem:[%s336 + $0x48] sm:$0xff] %v552
        %653 = vst [vmem:[%s336 + $0x50] sm:$0xff] %v557
        %654 = vst [vmem:[%s336 + $0x58] sm:$0xff] %v560
        %655 = vst [vmem:[%s336 + $0x60] sm:$0xff] %v565
        %656 = vst [vmem:[%s336 + $0x68] sm:$0xff] %v568
        %657 = vst [vmem:[%s336 + $0x70] sm:$0xff] %v573
        %658 = vst [vmem:[%s336 + $0x78] sm:$0xff] %v576
        %659 = vst [vmem:[%s336 + $0x80] sm:$0xff] %v581
        %660 = vst [vmem:[%s336 + $0x88] sm:$0xff] %v584
        %661 = vst [vmem:[%s336 + $0x90] sm:$0xff] %v589
        %662 = vst [vmem:[%s336 + $0x98] sm:$0xff] %v592
        %663 = vst [vmem:[%s336 + $0xa0] sm:$0xff] %v597
        %664 = vst [vmem:[%s336 + $0xa8] sm:$0xff] %v600
        %665 = vst [vmem:[%s336 + $0xb0] sm:$0xff] %v605
        %666 = vst [vmem:[%s336 + $0xb8] sm:$0xff] %v608
        %667 = vst [vmem:[%s336 + $0xc0] sm:$0xff] %v613
        %668 = vst [vmem:[%s336 + $0xc8] sm:$0xff] %v616
        %669 = vst [vmem:[%s336 + $0xd0] sm:$0xff] %v621
        %670 = vst [vmem:[%s336 + $0xd8] sm:$0xff] %v624
        %671 = vst [vmem:[%s336 + $0xe0] sm:$0xff] %v629
        %672 = vst [vmem:[%s336 + $0xe8] sm:$0xff] %v632
        %673 = vst [vmem:[%s336 + $0xf0] sm:$0xff] %v637
        %674 = vst [vmem:[%s336 + $0xf8] sm:$0xff] %v640
        %v675 = vpack.c.bf16 %v520, %v517
        %v676 = vpack.c.bf16 %v528, %v525
        %v677 = vpack.c.bf16 %v536, %v533
        %v678 = vpack.c.bf16 %v544, %v541
        %v679 = vpack.c.bf16 %v552, %v549
        %v680 = vpack.c.bf16 %v560, %v557
        %v681 = vpack.c.bf16 %v568, %v565
        %v682 = vpack.c.bf16 %v576, %v573
        %v683 = vpack.c.bf16 %v584, %v581
        %v684 = vpack.c.bf16 %v592, %v589
        %v685 = vpack.c.bf16 %v600, %v597
        %v686 = vpack.c.bf16 %v608, %v605
        %v687 = vpack.c.bf16 %v616, %v613
        %v688 = vpack.c.bf16 %v624, %v621
        %v689 = vpack.c.bf16 %v632, %v629
        %v690 = vpack.c.bf16 %v640, %v637
        %v691 = vld [vmem:[%s3] sm:$0xff]
        %v692 = vld [vmem:[%s3 + $0x8] sm:$0xf]
        %v693 = vld [vmem:[%s3 + $0xc] sm:$0xff]
        %v694 = vld [vmem:[%s3 + $0x14] sm:$0xf]
        %v695 = vld [vmem:[%s3 + $0x18] sm:$0xff]
        %v696 = vld [vmem:[%s3 + $0x20] sm:$0xf]
        %v697 = vld [vmem:[%s3 + $0x24] sm:$0xff]
        %v698 = vld [vmem:[%s3 + $0x2c] sm:$0xf]
        %v699 = vld [vmem:[%s3 + $0x30] sm:$0xff]
        %v700 = vld [vmem:[%s3 + $0x38] sm:$0xf]
        %v701 = vld [vmem:[%s3 + $0x3c] sm:$0xff]
        %v702 = vld [vmem:[%s3 + $0x44] sm:$0xf]
        %v703 = vld [vmem:[%s3 + $0x48] sm:$0xff]
        %v704 = vld [vmem:[%s3 + $0x50] sm:$0xf]
        %v705 = vld [vmem:[%s3 + $0x54] sm:$0xff]
        %v706 = vld [vmem:[%s3 + $0x5c] sm:$0xf]
        %v707 = vld [vmem:[%s3 + $0x60] sm:$0xff]
        %v708 = vld [vmem:[%s3 + $0x68] sm:$0xf]
        %v709 = vld [vmem:[%s3 + $0x6c] sm:$0xff]
        %v710 = vld [vmem:[%s3 + $0x74] sm:$0xf]
        %v711 = vld [vmem:[%s3 + $0x78] sm:$0xff]
        %v712 = vld [vmem:[%s3 + $0x80] sm:$0xf]
        %v713 = vld [vmem:[%s3 + $0x84] sm:$0xff]
        %v714 = vld [vmem:[%s3 + $0x8c] sm:$0xf]
        %v715 = vld [vmem:[%s3 + $0x90] sm:$0xff]
        %v716 = vld [vmem:[%s3 + $0x98] sm:$0xf]
        %v717 = vld [vmem:[%s3 + $0x9c] sm:$0xff]
        %v718 = vld [vmem:[%s3 + $0xa4] sm:$0xf]
        %v719 = vld [vmem:[%s3 + $0xa8] sm:$0xff]
        %v720 = vld [vmem:[%s3 + $0xb0] sm:$0xf]
        %v721 = vld [vmem:[%s3 + $0xb4] sm:$0xff]
        %v722 = vld [vmem:[%s3 + $0xbc] sm:$0xf]
        %v723 = vld [vmem:[%s4] sm:$0x7]
        %v725 = vlaneseq
        %v726 = vshrl.u32 %v725, 7
        %v727 = vsub.s32 0, %v726
        %v728 = vrot.slane %v723, %v727
        %v729 = vlaneseq
        %v730 = vshrl.u32 %v729, 7
        %v731 = vsub.s32 1, %v730
        %v732 = vrot.slane %v723, %v731
        %v733 = vlaneseq
        %v734 = vshrl.u32 %v733, 7
        %v735 = vsub.s32 2, %v734
        %v736 = vrot.slane %v723, %v735
        %v772 = vunpack.c.l.b16 %v691
        %v773 = vunpack.c.h.b16 %v691
        %v774 = vunpack.c.l.b16 %v692
        %v775 = vunpack.c.l.b16 %v693
        %v776 = vunpack.c.h.b16 %v693
        %v777 = vunpack.c.l.b16 %v694
        %v778 = vunpack.c.l.b16 %v695
        %v779 = vunpack.c.h.b16 %v695
        %v780 = vunpack.c.l.b16 %v696
        %v781 = vunpack.c.l.b16 %v697
        %v782 = vunpack.c.h.b16 %v697
        %v783 = vunpack.c.l.b16 %v698
        %v784 = vunpack.c.l.b16 %v699
        %v785 = vunpack.c.h.b16 %v699
        %v786 = vunpack.c.l.b16 %v700
        %v787 = vunpack.c.l.b16 %v701
        %v788 = vunpack.c.h.b16 %v701
        %v789 = vunpack.c.l.b16 %v702
        %v790 = vunpack.c.l.b16 %v703
        %v791 = vunpack.c.h.b16 %v703
        %v792 = vunpack.c.l.b16 %v704
        %v793 = vunpack.c.l.b16 %v705
        %v794 = vunpack.c.h.b16 %v705
        %v795 = vunpack.c.l.b16 %v706
        %v796 = vunpack.c.l.b16 %v707
        %v797 = vunpack.c.h.b16 %v707
        %v798 = vunpack.c.l.b16 %v708
        %v799 = vunpack.c.l.b16 %v709
        %v800 = vunpack.c.h.b16 %v709
        %v801 = vunpack.c.l.b16 %v710
        %v802 = vunpack.c.l.b16 %v711
        %v803 = vunpack.c.h.b16 %v711
        %v804 = vunpack.c.l.b16 %v712
        %v805 = vunpack.c.l.b16 %v713
        %v806 = vunpack.c.h.b16 %v713
        %v807 = vunpack.c.l.b16 %v714
        %v808 = vunpack.c.l.b16 %v715
        %v809 = vunpack.c.h.b16 %v715
        %v810 = vunpack.c.l.b16 %v716
        %v811 = vunpack.c.l.b16 %v717
        %v812 = vunpack.c.h.b16 %v717
        %v813 = vunpack.c.l.b16 %v718
        %v814 = vunpack.c.l.b16 %v719
        %v815 = vunpack.c.h.b16 %v719
        %v816 = vunpack.c.l.b16 %v720
        %v817 = vunpack.c.l.b16 %v721
        %v818 = vunpack.c.h.b16 %v721
        %v819 = vunpack.c.l.b16 %v722
        %v820 = vpack.c.b16 %v775, %v772
        %v821 = vpack.c.b16 %v776, %v773
        %v822 = vpack.c.b16 %v777, %v774
        %v823 = vpack.c.b16 %v781, %v778
        %v824 = vpack.c.b16 %v782, %v779
        %v825 = vpack.c.b16 %v783, %v780
        %v826 = vpack.c.b16 %v787, %v784
        %v827 = vpack.c.b16 %v788, %v785
        %v828 = vpack.c.b16 %v789, %v786
        %v829 = vpack.c.b16 %v793, %v790
        %v830 = vpack.c.b16 %v794, %v791
        %v831 = vpack.c.b16 %v795, %v792
        %v832 = vpack.c.b16 %v799, %v796
        %v833 = vpack.c.b16 %v800, %v797
        %v834 = vpack.c.b16 %v801, %v798
        %v835 = vpack.c.b16 %v805, %v802
        %v836 = vpack.c.b16 %v806, %v803
        %v837 = vpack.c.b16 %v807, %v804
        %v838 = vpack.c.b16 %v811, %v808
        %v839 = vpack.c.b16 %v812, %v809
        %v840 = vpack.c.b16 %v813, %v810
        %v841 = vpack.c.b16 %v817, %v814
        %v842 = vpack.c.b16 %v818, %v815
        %v843 = vpack.c.b16 %v819, %v816
        %868 = vmatprep.subr.bf16.mxu0 %v821
        %869 = vmatpush1.bf16.msra.mxu0 %v820
        %870 = vmatprep.subr.bf16.mxu0 %v824
        %871 = vmatpush1.bf16.msra.mxu0 %v823
        %872 = vmatprep.subr.bf16.mxu0 %v827
        %873 = vmatpush1.bf16.msra.mxu0 %v826
        %874 = vmatprep.subr.bf16.mxu0 %v830
        %875 = vmatpush1.bf16.msra.mxu0 %v829
        %876 = vmatprep.subr.bf16.mxu0 %v833
        %877 = vmatpush1.bf16.msra.mxu0 %v832
        %878 = vmatprep.subr.bf16.mxu0 %v836
        %879 = vmatpush1.bf16.msra.mxu0 %v835
        %880 = vmatprep.subr.bf16.mxu0 %v839
        %881 = vmatpush1.bf16.msra.mxu0 %v838
        %882 = vmatprep.subr.bf16.mxu0 %v842
        %883 = vmatpush1.bf16.msra.mxu0 %v841
        %884 = vmatprep.subr.bf16.mxu0 0
        %885 = vmatpush1.bf16.msra.mxu0 0
        %886 = vmatprep.subr.bf16.mxu0 0
        %887 = vmatpush1.bf16.msra.mxu0 0
        %888 = vmatprep.subr.bf16.mxu0 0
        %889 = vmatpush1.bf16.msra.mxu0 0
        %890 = vmatprep.subr.bf16.mxu0 0
        %891 = vmatpush1.bf16.msra.mxu0 0
        %892 = vmatprep.subr.bf16.mxu0 0
        %893 = vmatpush1.bf16.msra.mxu0 0
        %894 = vmatprep.subr.bf16.mxu0 0
        %895 = vmatpush1.bf16.msra.mxu0 0
        %896 = vmatprep.subr.bf16.mxu0 0
        %897 = vmatpush1.bf16.msra.mxu0 0
        %898 = vmatprep.subr.bf16.mxu0 0
        %899 = vmatpush1.bf16.msra.mxu0 0
        %900 = vmatprep.mubr.bf16.mxu0 0
        %901 = vmatmul.mubr.bf16.gmra.mrb[0].mxu0 %v675
        %v902 = vpop.f32.mrb[0].mxu0
        %v903 = vadd.f32 %v728, %v902
        %v904 = vpop.f32.mrb[0].mxu0
        %v905 = vadd.f32 %v732, %v904
        %v906 = vpop.f32.mrb[0].mxu0
        %v907 = vadd.f32 %v728, %v906
        %v908 = vpop.f32.mrb[0].mxu0
        %v909 = vadd.f32 %v732, %v908
        %910 = vmatprep.mubr.bf16.mxu0 0
        %911 = vmatmul.mubr.bf16.gmra.mrb[0].mxu0 %v676
        %v912 = vpop.f32.mrb[0].mxu0
        %v913 = vadd.f32 %v728, %v912
        %v914 = vpop.f32.mrb[0].mxu0
        %v915 = vadd.f32 %v732, %v914
        %v916 = vpop.f32.mrb[0].mxu0
        %v917 = vadd.f32 %v728, %v916
        %v918 = vpop.f32.mrb[0].mxu0
        %v919 = vadd.f32 %v732, %v918
        %920 = vmatprep.mubr.bf16.mxu0 0
        %921 = vmatmul.mubr.bf16.gmra.mrb[0].mxu0 %v677
        %v922 = vpop.f32.mrb[0].mxu0
        %v923 = vadd.f32 %v728, %v922
        %v924 = vpop.f32.mrb[0].mxu0
        %v925 = vadd.f32 %v732, %v924
        %v926 = vpop.f32.mrb[0].mxu0
        %v927 = vadd.f32 %v728, %v926
        %v928 = vpop.f32.mrb[0].mxu0
        %v929 = vadd.f32 %v732, %v928
        %930 = vmatprep.mubr.bf16.mxu0 0
        %931 = vmatmul.mubr.bf16.gmra.mrb[0].mxu0 %v678
        %v932 = vpop.f32.mrb[0].mxu0
        %v933 = vadd.f32 %v728, %v932
        %v934 = vpop.f32.mrb[0].mxu0
        %v935 = vadd.f32 %v732, %v934
        %v936 = vpop.f32.mrb[0].mxu0
        %v937 = vadd.f32 %v728, %v936
        %v938 = vpop.f32.mrb[0].mxu0
        %v939 = vadd.f32 %v732, %v938
        %940 = vmatprep.mubr.bf16.mxu0 0
        %941 = vmatmul.mubr.bf16.gmra.mrb[0].mxu0 %v679
        %v942 = vpop.f32.mrb[0].mxu0
        %v943 = vadd.f32 %v728, %v942
        %v944 = vpop.f32.mrb[0].mxu0
        %v945 = vadd.f32 %v732, %v944
        %v946 = vpop.f32.mrb[0].mxu0
        %v947 = vadd.f32 %v728, %v946
        %v948 = vpop.f32.mrb[0].mxu0
        %v949 = vadd.f32 %v732, %v948
        %950 = vmatprep.mubr.bf16.mxu0 0
        %951 = vmatmul.mubr.bf16.gmra.mrb[0].mxu0 %v680
        %v952 = vpop.f32.mrb[0].mxu0
        %v953 = vadd.f32 %v728, %v952
        %v954 = vpop.f32.mrb[0].mxu0
        %v955 = vadd.f32 %v732, %v954
        %v956 = vpop.f32.mrb[0].mxu0
        %v957 = vadd.f32 %v728, %v956
        %v958 = vpop.f32.mrb[0].mxu0
        %v959 = vadd.f32 %v732, %v958
        %960 = vmatprep.mubr.bf16.mxu0 0
        %961 = vmatmul.mubr.bf16.gmra.mrb[0].mxu0 %v681
        %v962 = vpop.f32.mrb[0].mxu0
        %v963 = vadd.f32 %v728, %v962
        %v964 = vpop.f32.mrb[0].mxu0
        %v965 = vadd.f32 %v732, %v964
        %v966 = vpop.f32.mrb[0].mxu0
        %v967 = vadd.f32 %v728, %v966
        %v968 = vpop.f32.mrb[0].mxu0
        %v969 = vadd.f32 %v732, %v968
        %970 = vmatprep.mubr.bf16.mxu0 0
        %971 = vmatmul.mubr.bf16.gmra.mrb[0].mxu0 %v682
        %v972 = vpop.f32.mrb[0].mxu0
        %v973 = vadd.f32 %v728, %v972
        %v974 = vpop.f32.mrb[0].mxu0
        %v975 = vadd.f32 %v732, %v974
        %v976 = vpop.f32.mrb[0].mxu0
        %v977 = vadd.f32 %v728, %v976
        %v978 = vpop.f32.mrb[0].mxu0
        %v979 = vadd.f32 %v732, %v978
        %980 = vmatprep.mubr.bf16.mxu0 0
        %981 = vmatmul.mubr.bf16.gmra.mrb[0].mxu0 %v683
        %v982 = vpop.f32.mrb[0].mxu0
        %v983 = vadd.f32 %v728, %v982
        %v984 = vpop.f32.mrb[0].mxu0
        %v985 = vadd.f32 %v732, %v984
        %v986 = vpop.f32.mrb[0].mxu0
        %v987 = vadd.f32 %v728, %v986
        %v988 = vpop.f32.mrb[0].mxu0
        %v989 = vadd.f32 %v732, %v988
        %990 = vmatprep.mubr.bf16.mxu0 0
        %991 = vmatmul.mubr.bf16.gmra.mrb[0].mxu0 %v684
        %v992 = vpop.f32.mrb[0].mxu0
        %v993 = vadd.f32 %v728, %v992
        %v994 = vpop.f32.mrb[0].mxu0
        %v995 = vadd.f32 %v732, %v994
        %v996 = vpop.f32.mrb[0].mxu0
        %v997 = vadd.f32 %v728, %v996
        %v998 = vpop.f32.mrb[0].mxu0
        %v999 = vadd.f32 %v732, %v998
        %1000 = vmatprep.mubr.bf16.mxu0 0
        %1001 = vmatmul.mubr.bf16.gmra.mrb[0].mxu0 %v685
        %v1002 = vpop.f32.mrb[0].mxu0
        %v1003 = vadd.f32 %v728, %v1002
        %v1004 = vpop.f32.mrb[0].mxu0
        %v1005 = vadd.f32 %v732, %v1004
        %v1006 = vpop.f32.mrb[0].mxu0
        %v1007 = vadd.f32 %v728, %v1006
        %v1008 = vpop.f32.mrb[0].mxu0
        %v1009 = vadd.f32 %v732, %v1008
        %1010 = vmatprep.mubr.bf16.mxu0 0
        %1011 = vmatmul.mubr.bf16.gmra.mrb[0].mxu0 %v686
        %v1012 = vpop.f32.mrb[0].mxu0
        %v1013 = vadd.f32 %v728, %v1012
        %v1014 = vpop.f32.mrb[0].mxu0
        %v1015 = vadd.f32 %v732, %v1014
        %v1016 = vpop.f32.mrb[0].mxu0
        %v1017 = vadd.f32 %v728, %v1016
        %v1018 = vpop.f32.mrb[0].mxu0
        %v1019 = vadd.f32 %v732, %v1018
        %1020 = vmatprep.mubr.bf16.mxu0 0
        %1021 = vmatmul.mubr.bf16.gmra.mrb[0].mxu0 %v687
        %v1022 = vpop.f32.mrb[0].mxu0
        %v1023 = vadd.f32 %v728, %v1022
        %v1024 = vpop.f32.mrb[0].mxu0
        %v1025 = vadd.f32 %v732, %v1024
        %v1026 = vpop.f32.mrb[0].mxu0
        %v1027 = vadd.f32 %v728, %v1026
        %v1028 = vpop.f32.mrb[0].mxu0
        %v1029 = vadd.f32 %v732, %v1028
        %1030 = vmatprep.mubr.bf16.mxu0 0
        %1031 = vmatmul.mubr.bf16.gmra.mrb[0].mxu0 %v688
        %v1032 = vpop.f32.mrb[0].mxu0
        %v1033 = vadd.f32 %v728, %v1032
        %v1034 = vpop.f32.mrb[0].mxu0
        %v1035 = vadd.f32 %v732, %v1034
        %v1036 = vpop.f32.mrb[0].mxu0
        %v1037 = vadd.f32 %v728, %v1036
        %v1038 = vpop.f32.mrb[0].mxu0
        %v1039 = vadd.f32 %v732, %v1038
        %1040 = vmatprep.mubr.bf16.mxu0 0
        %1041 = vmatmul.mubr.bf16.gmra.mrb[0].mxu0 %v689
        %v1042 = vpop.f32.mrb[0].mxu0
        %v1043 = vadd.f32 %v728, %v1042
        %v1044 = vpop.f32.mrb[0].mxu0
        %v1045 = vadd.f32 %v732, %v1044
        %v1046 = vpop.f32.mrb[0].mxu0
        %v1047 = vadd.f32 %v728, %v1046
        %v1048 = vpop.f32.mrb[0].mxu0
        %v1049 = vadd.f32 %v732, %v1048
        %1050 = vmatprep.mubr.bf16.mxu0 0
        %1051 = vmatmul.mubr.bf16.gmra.mrb[0].mxu0 %v690
        %v1052 = vpop.f32.mrb[0].mxu0
        %v1053 = vadd.f32 %v728, %v1052
        %v1054 = vpop.f32.mrb[0].mxu0
        %v1055 = vadd.f32 %v732, %v1054
        %v1056 = vpop.f32.mrb[0].mxu0
        %v1057 = vadd.f32 %v728, %v1056
        %v1058 = vpop.f32.mrb[0].mxu0
        %v1059 = vadd.f32 %v732, %v1058
        %1060 = vdwg.mxu0
        %1061 = vmatprep.subr.bf16.mxu0 0
        %1062 = vmatpush1.bf16.msra.mxu0 %v822
        %1063 = vmatprep.subr.bf16.mxu0 0
        %1064 = vmatpush1.bf16.msra.mxu0 %v825
        %1065 = vmatprep.subr.bf16.mxu0 0
        %1066 = vmatpush1.bf16.msra.mxu0 %v828
        %1067 = vmatprep.subr.bf16.mxu0 0
        %1068 = vmatpush1.bf16.msra.mxu0 %v831
        %1069 = vmatprep.subr.bf16.mxu0 0
        %1070 = vmatpush1.bf16.msra.mxu0 %v834
        %1071 = vmatprep.subr.bf16.mxu0 0
        %1072 = vmatpush1.bf16.msra.mxu0 %v837
        %1073 = vmatprep.subr.bf16.mxu0 0
        %1074 = vmatpush1.bf16.msra.mxu0 %v840
        %1075 = vmatprep.subr.bf16.mxu0 0
        %1076 = vmatpush1.bf16.msra.mxu0 %v843
        %1077 = vmatprep.subr.bf16.mxu0 0
        %1078 = vmatpush1.bf16.msra.mxu0 0
        %1079 = vmatprep.subr.bf16.mxu0 0
        %1080 = vmatpush1.bf16.msra.mxu0 0
        %1081 = vmatprep.subr.bf16.mxu0 0
        %1082 = vmatpush1.bf16.msra.mxu0 0
        %1083 = vmatprep.subr.bf16.mxu0 0
        %1084 = vmatpush1.bf16.msra.mxu0 0
        %1085 = vmatprep.subr.bf16.mxu0 0
        %1086 = vmatpush1.bf16.msra.mxu0 0
        %1087 = vmatprep.subr.bf16.mxu0 0
        %1088 = vmatpush1.bf16.msra.mxu0 0
        %1089 = vmatprep.subr.bf16.mxu0 0
        %1090 = vmatpush1.bf16.msra.mxu0 0
        %1091 = vmatprep.subr.bf16.mxu0 0
        %1092 = vmatpush1.bf16.msra.mxu0 0
        %1093 = vmatprep.mubr.bf16.mxu0 0
        %1094 = vmatmul.mubr.bf16.gmra.mrb[0].mxu0 %v675
        %v1095 = vpop.f32.mrb[0].mxu0
        %v1096 = vadd.f32 %v736, %v1095
        %v1097 = vpop.f32.mrb[0].mxu0
        %v1098 = vpop.f32.mrb[0].mxu0
        %v1099 = vadd.f32 %v736, %v1098
        %v1100 = vpop.f32.mrb[0].mxu0
        %1101 = vmatprep.mubr.bf16.mxu0 0
        %1102 = vmatmul.mubr.bf16.gmra.mrb[0].mxu0 %v676
        %v1103 = vpop.f32.mrb[0].mxu0
        %v1104 = vadd.f32 %v736, %v1103
        %v1105 = vpop.f32.mrb[0].mxu0
        %v1106 = vpop.f32.mrb[0].mxu0
        %v1107 = vadd.f32 %v736, %v1106
        %v1108 = vpop.f32.mrb[0].mxu0
        %1109 = vmatprep.mubr.bf16.mxu0 0
        %1110 = vmatmul.mubr.bf16.gmra.mrb[0].mxu0 %v677
        %v1111 = vpop.f32.mrb[0].mxu0
        %v1112 = vadd.f32 %v736, %v1111
        %v1113 = vpop.f32.mrb[0].mxu0
        %v1114 = vpop.f32.mrb[0].mxu0
        %v1115 = vadd.f32 %v736, %v1114
        %v1116 = vpop.f32.mrb[0].mxu0
        %1117 = vmatprep.mubr.bf16.mxu0 0
        %1118 = vmatmul.mubr.bf16.gmra.mrb[0].mxu0 %v678
        %v1119 = vpop.f32.mrb[0].mxu0
        %v1120 = vadd.f32 %v736, %v1119
        %v1121 = vpop.f32.mrb[0].mxu0
        %v1122 = vpop.f32.mrb[0].mxu0
        %v1123 = vadd.f32 %v736, %v1122
        %v1124 = vpop.f32.mrb[0].mxu0
        %1125 = vmatprep.mubr.bf16.mxu0 0
        %1126 = vmatmul.mubr.bf16.gmra.mrb[0].mxu0 %v679
        %v1127 = vpop.f32.mrb[0].mxu0
        %v1128 = vadd.f32 %v736, %v1127
        %v1129 = vpop.f32.mrb[0].mxu0
        %v1130 = vpop.f32.mrb[0].mxu0
        %v1131 = vadd.f32 %v736, %v1130
        %v1132 = vpop.f32.mrb[0].mxu0
        %1133 = vmatprep.mubr.bf16.mxu0 0
        %1134 = vmatmul.mubr.bf16.gmra.mrb[0].mxu0 %v680
        %v1135 = vpop.f32.mrb[0].mxu0
        %v1136 = vadd.f32 %v736, %v1135
        %v1137 = vpop.f32.mrb[0].mxu0
        %v1138 = vpop.f32.mrb[0].mxu0
        %v1139 = vadd.f32 %v736, %v1138
        %v1140 = vpop.f32.mrb[0].mxu0
        %1141 = vmatprep.mubr.bf16.mxu0 0
        %1142 = vmatmul.mubr.bf16.gmra.mrb[0].mxu0 %v681
        %v1143 = vpop.f32.mrb[0].mxu0
        %v1144 = vadd.f32 %v736, %v1143
        %v1145 = vpop.f32.mrb[0].mxu0
        %v1146 = vpop.f32.mrb[0].mxu0
        %v1147 = vadd.f32 %v736, %v1146
        %v1148 = vpop.f32.mrb[0].mxu0
        %1149 = vmatprep.mubr.bf16.mxu0 0
        %1150 = vmatmul.mubr.bf16.gmra.mrb[0].mxu0 %v682
        %v1151 = vpop.f32.mrb[0].mxu0
        %v1152 = vadd.f32 %v736, %v1151
        %v1153 = vpop.f32.mrb[0].mxu0
        %v1154 = vpop.f32.mrb[0].mxu0
        %v1155 = vadd.f32 %v736, %v1154
        %v1156 = vpop.f32.mrb[0].mxu0
        %1157 = vmatprep.mubr.bf16.mxu0 0
        %1158 = vmatmul.mubr.bf16.gmra.mrb[0].mxu0 %v683
        %v1159 = vpop.f32.mrb[0].mxu0
        %v1160 = vadd.f32 %v736, %v1159
        %v1161 = vpop.f32.mrb[0].mxu0
        %v1162 = vpop.f32.mrb[0].mxu0
        %v1163 = vadd.f32 %v736, %v1162
        %v1164 = vpop.f32.mrb[0].mxu0
        %1165 = vmatprep.mubr.bf16.mxu0 0
        %1166 = vmatmul.mubr.bf16.gmra.mrb[0].mxu0 %v684
        %v1167 = vpop.f32.mrb[0].mxu0
        %v1168 = vadd.f32 %v736, %v1167
        %v1169 = vpop.f32.mrb[0].mxu0
        %v1170 = vpop.f32.mrb[0].mxu0
        %v1171 = vadd.f32 %v736, %v1170
        %v1172 = vpop.f32.mrb[0].mxu0
        %1173 = vmatprep.mubr.bf16.mxu0 0
        %1174 = vmatmul.mubr.bf16.gmra.mrb[0].mxu0 %v685
        %v1175 = vpop.f32.mrb[0].mxu0
        %v1176 = vadd.f32 %v736, %v1175
        %v1177 = vpop.f32.mrb[0].mxu0
        %v1178 = vpop.f32.mrb[0].mxu0
        %v1179 = vadd.f32 %v736, %v1178
        %v1180 = vpop.f32.mrb[0].mxu0
        %1181 = vmatprep.mubr.bf16.mxu0 0
        %1182 = vmatmul.mubr.bf16.gmra.mrb[0].mxu0 %v686
        %v1183 = vpop.f32.mrb[0].mxu0
        %v1184 = vadd.f32 %v736, %v1183
        %v1185 = vpop.f32.mrb[0].mxu0
        %v1186 = vpop.f32.mrb[0].mxu0
        %v1187 = vadd.f32 %v736, %v1186
        %v1188 = vpop.f32.mrb[0].mxu0
        %1189 = vmatprep.mubr.bf16.mxu0 0
        %1190 = vmatmul.mubr.bf16.gmra.mrb[0].mxu0 %v687
        %v1191 = vpop.f32.mrb[0].mxu0
        %v1192 = vadd.f32 %v736, %v1191
        %v1193 = vpop.f32.mrb[0].mxu0
        %v1194 = vpop.f32.mrb[0].mxu0
        %v1195 = vadd.f32 %v736, %v1194
        %v1196 = vpop.f32.mrb[0].mxu0
        %1197 = vmatprep.mubr.bf16.mxu0 0
        %1198 = vmatmul.mubr.bf16.gmra.mrb[0].mxu0 %v688
        %v1199 = vpop.f32.mrb[0].mxu0
        %v1200 = vadd.f32 %v736, %v1199
        %v1201 = vpop.f32.mrb[0].mxu0
        %v1202 = vpop.f32.mrb[0].mxu0
        %v1203 = vadd.f32 %v736, %v1202
        %v1204 = vpop.f32.mrb[0].mxu0
        %1205 = vmatprep.mubr.bf16.mxu0 0
        %1206 = vmatmul.mubr.bf16.gmra.mrb[0].mxu0 %v689
        %v1207 = vpop.f32.mrb[0].mxu0
        %v1208 = vadd.f32 %v736, %v1207
        %v1209 = vpop.f32.mrb[0].mxu0
        %v1210 = vpop.f32.mrb[0].mxu0
        %v1211 = vadd.f32 %v736, %v1210
        %v1212 = vpop.f32.mrb[0].mxu0
        %1213 = vmatprep.mubr.bf16.mxu0 0
        %1214 = vmatmul.mubr.bf16.gmra.mrb[0].mxu0 %v690
        %v1215 = vpop.f32.mrb[0].mxu0
        %v1216 = vadd.f32 %v736, %v1215
        %v1217 = vpop.f32.mrb[0].mxu0
        %v1218 = vpop.f32.mrb[0].mxu0
        %v1219 = vadd.f32 %v736, %v1218
        %v1220 = vpop.f32.mrb[0].mxu0
        %1221 = vdwg.mxu0
        %v1222 = vpack.c.bf16 %v907, %v903
        %v1223 = vpack.c.bf16 %v917, %v913
        %v1224 = vpack.c.bf16 %v927, %v923
        %v1225 = vpack.c.bf16 %v937, %v933
        %v1226 = vpack.c.bf16 %v947, %v943
        %v1227 = vpack.c.bf16 %v957, %v953
        %v1228 = vpack.c.bf16 %v967, %v963
        %v1229 = vpack.c.bf16 %v977, %v973
        %v1230 = vpack.c.bf16 %v987, %v983
        %v1231 = vpack.c.bf16 %v997, %v993
        %v1232 = vpack.c.bf16 %v1007, %v1003
        %v1233 = vpack.c.bf16 %v1017, %v1013
        %v1234 = vpack.c.bf16 %v1027, %v1023
        %v1235 = vpack.c.bf16 %v1037, %v1033
        %v1236 = vpack.c.bf16 %v1047, %v1043
        %v1237 = vpack.c.bf16 %v1057, %v1053
        %v1254 = vunpack.c.l.b16 %v1222
        %v1255 = vunpack.c.h.b16 %v1222
        %v1256 = vunpack.c.l.b16 %v1223
        %v1257 = vunpack.c.h.b16 %v1223
        %v1258 = vunpack.c.l.b16 %v1224
        %v1259 = vunpack.c.h.b16 %v1224
        %v1260 = vunpack.c.l.b16 %v1225
        %v1261 = vunpack.c.h.b16 %v1225
        %v1262 = vunpack.c.l.b16 %v1226
        %v1263 = vunpack.c.h.b16 %v1226
        %v1264 = vunpack.c.l.b16 %v1227
        %v1265 = vunpack.c.h.b16 %v1227
        %v1266 = vunpack.c.l.b16 %v1228
        %v1267 = vunpack.c.h.b16 %v1228
        %v1268 = vunpack.c.l.b16 %v1229
        %v1269 = vunpack.c.h.b16 %v1229
        %v1270 = vunpack.c.l.b16 %v1230
        %v1271 = vunpack.c.h.b16 %v1230
        %v1272 = vunpack.c.l.b16 %v1231
        %v1273 = vunpack.c.h.b16 %v1231
        %v1274 = vunpack.c.l.b16 %v1232
        %v1275 = vunpack.c.h.b16 %v1232
        %v1276 = vunpack.c.l.b16 %v1233
        %v1277 = vunpack.c.h.b16 %v1233
        %v1278 = vunpack.c.l.b16 %v1234
        %v1279 = vunpack.c.h.b16 %v1234
        %v1280 = vunpack.c.l.b16 %v1235
        %v1281 = vunpack.c.h.b16 %v1235
        %v1282 = vunpack.c.l.b16 %v1236
        %v1283 = vunpack.c.h.b16 %v1236
        %v1284 = vunpack.c.l.b16 %v1237
        %v1285 = vunpack.c.h.b16 %v1237
        %v1286 = vpack.c.b16 %v1254, %v1254
        %v1287 = vpack.c.b16 %v1255, %v1255
        %v1288 = vpack.c.b16 %v1256, %v1256
        %v1289 = vpack.c.b16 %v1257, %v1257
        %v1290 = vpack.c.b16 %v1258, %v1258
        %v1291 = vpack.c.b16 %v1259, %v1259
        %v1292 = vpack.c.b16 %v1260, %v1260
        %v1293 = vpack.c.b16 %v1261, %v1261
        %v1294 = vpack.c.b16 %v1262, %v1262
        %v1295 = vpack.c.b16 %v1263, %v1263
        %v1296 = vpack.c.b16 %v1264, %v1264
        %v1297 = vpack.c.b16 %v1265, %v1265
        %v1298 = vpack.c.b16 %v1266, %v1266
        %v1299 = vpack.c.b16 %v1267, %v1267
        %v1300 = vpack.c.b16 %v1268, %v1268
        %v1301 = vpack.c.b16 %v1269, %v1269
        %v1302 = vpack.c.b16 %v1270, %v1270
        %v1303 = vpack.c.b16 %v1271, %v1271
        %v1304 = vpack.c.b16 %v1272, %v1272
        %v1305 = vpack.c.b16 %v1273, %v1273
        %v1306 = vpack.c.b16 %v1274, %v1274
        %v1307 = vpack.c.b16 %v1275, %v1275
        %v1308 = vpack.c.b16 %v1276, %v1276
        %v1309 = vpack.c.b16 %v1277, %v1277
        %v1310 = vpack.c.b16 %v1278, %v1278
        %v1311 = vpack.c.b16 %v1279, %v1279
        %v1312 = vpack.c.b16 %v1280, %v1280
        %v1313 = vpack.c.b16 %v1281, %v1281
        %v1314 = vpack.c.b16 %v1282, %v1282
        %v1315 = vpack.c.b16 %v1283, %v1283
        %v1316 = vpack.c.b16 %v1284, %v1284
        %v1317 = vpack.c.b16 %v1285, %v1285
        %1350 = vst [vmem:[%s343] sm:$0xf] %v1286
        %1351 = vst [vmem:[%s343 + $0x4] sm:$0xf] %v1287
        %1352 = vst [vmem:[%s343 + $0x8] sm:$0xf] %v1288
        %1353 = vst [vmem:[%s343 + $0xc] sm:$0xf] %v1289
        %1354 = vst [vmem:[%s343 + $0x10] sm:$0xf] %v1290
        %1355 = vst [vmem:[%s343 + $0x14] sm:$0xf] %v1291
        %1356 = vst [vmem:[%s343 + $0x18] sm:$0xf] %v1292
        %1357 = vst [vmem:[%s343 + $0x1c] sm:$0xf] %v1293
        %1358 = vst [vmem:[%s343 + $0x20] sm:$0xf] %v1294
        %1359 = vst [vmem:[%s343 + $0x24] sm:$0xf] %v1295
        %1360 = vst [vmem:[%s343 + $0x28] sm:$0xf] %v1296
        %1361 = vst [vmem:[%s343 + $0x2c] sm:$0xf] %v1297
        %1362 = vst [vmem:[%s343 + $0x30] sm:$0xf] %v1298
        %1363 = vst [vmem:[%s343 + $0x34] sm:$0xf] %v1299
        %1364 = vst [vmem:[%s343 + $0x38] sm:$0xf] %v1300
        %1365 = vst [vmem:[%s343 + $0x3c] sm:$0xf] %v1301
        %1366 = vst [vmem:[%s343 + $0x40] sm:$0xf] %v1302
        %1367 = vst [vmem:[%s343 + $0x44] sm:$0xf] %v1303
        %1368 = vst [vmem:[%s343 + $0x48] sm:$0xf] %v1304
        %1369 = vst [vmem:[%s343 + $0x4c] sm:$0xf] %v1305
        %1370 = vst [vmem:[%s343 + $0x50] sm:$0xf] %v1306
        %1371 = vst [vmem:[%s343 + $0x54] sm:$0xf] %v1307
        %1372 = vst [vmem:[%s343 + $0x58] sm:$0xf] %v1308
        %1373 = vst [vmem:[%s343 + $0x5c] sm:$0xf] %v1309
        %1374 = vst [vmem:[%s343 + $0x60] sm:$0xf] %v1310
        %1375 = vst [vmem:[%s343 + $0x64] sm:$0xf] %v1311
        %1376 = vst [vmem:[%s343 + $0x68] sm:$0xf] %v1312
        %1377 = vst [vmem:[%s343 + $0x6c] sm:$0xf] %v1313
        %1378 = vst [vmem:[%s343 + $0x70] sm:$0xf] %v1314
        %1379 = vst [vmem:[%s343 + $0x74] sm:$0xf] %v1315
        %1380 = vst [vmem:[%s343 + $0x78] sm:$0xf] %v1316
        %1381 = vst [vmem:[%s343 + $0x7c] sm:$0xf] %v1317
        %1382 = vxpose.xlu0.b32.start [1/16] %v905, 128
        %1383 = vxpose.xlu0.b32.cont [2/16] %v909, 128
        %1384 = vxpose.xlu0.b32.cont [3/16] %v915, 128
        %1385 = vxpose.xlu0.b32.cont [4/16] %v919, 128
        %1386 = vxpose.xlu0.b32.cont [5/16] %v925, 128
        %1387 = vxpose.xlu0.b32.cont [6/16] %v929, 128
        %1388 = vxpose.xlu0.b32.cont [7/16] %v935, 128
        %1389 = vxpose.xlu0.b32.cont [8/16] %v939, 128
        %1390 = vxpose.xlu0.b32.cont [9/16] %v945, 128
        %1391 = vxpose.xlu0.b32.cont [10/16] %v949, 128
        %1392 = vxpose.xlu0.b32.cont [11/16] %v955, 128
        %1393 = vxpose.xlu0.b32.cont [12/16] %v959, 128
        %1394 = vxpose.xlu0.b32.cont [13/16] %v965, 128
        %1395 = vxpose.xlu0.b32.cont [14/16] %v969, 128
        %1396 = vxpose.xlu0.b32.cont [15/16] %v975, 128
        %1397 = vxpose.xlu0.b32.end [16/16] %v979, 128
        %v1398 = vpop.trf.xlu0
        %v1399 = vpop.trf.xlu0
        %v1400 = vpop.trf.xlu0
        %v1401 = vpop.trf.xlu0
        %v1402 = vpop.trf.xlu0
        %v1403 = vpop.trf.xlu0
        %v1404 = vpop.trf.xlu0
        %v1405 = vpop.trf.xlu0
        %v1406 = vpop.trf.xlu0
        %v1407 = vpop.trf.xlu0
        %v1408 = vpop.trf.xlu0
        %v1409 = vpop.trf.xlu0
        %v1410 = vpop.trf.xlu0
        %v1411 = vpop.trf.xlu0
        %v1412 = vpop.trf.xlu0
        %v1413 = vpop.trf.xlu0
        %1414 = vxpose.xlu0.b32.start [1/16] %v985, 128
        %1415 = vxpose.xlu0.b32.cont [2/16] %v989, 128
        %1416 = vxpose.xlu0.b32.cont [3/16] %v995, 128
        %1417 = vxpose.xlu0.b32.cont [4/16] %v999, 128
        %1418 = vxpose.xlu0.b32.cont [5/16] %v1005, 128
        %1419 = vxpose.xlu0.b32.cont [6/16] %v1009, 128
        %1420 = vxpose.xlu0.b32.cont [7/16] %v1015, 128
        %1421 = vxpose.xlu0.b32.cont [8/16] %v1019, 128
        %1422 = vxpose.xlu0.b32.cont [9/16] %v1025, 128
        %1423 = vxpose.xlu0.b32.cont [10/16] %v1029, 128
        %1424 = vxpose.xlu0.b32.cont [11/16] %v1035, 128
        %1425 = vxpose.xlu0.b32.cont [12/16] %v1039, 128
        %1426 = vxpose.xlu0.b32.cont [13/16] %v1045, 128
        %1427 = vxpose.xlu0.b32.cont [14/16] %v1049, 128
        %1428 = vxpose.xlu0.b32.cont [15/16] %v1055, 128
        %1429 = vxpose.xlu0.b32.end [16/16] %v1059, 128
        %v1430 = vpop.trf.xlu0
        %v1431 = vpop.trf.xlu0
        %v1432 = vpop.trf.xlu0
        %v1433 = vpop.trf.xlu0
        %v1434 = vpop.trf.xlu0
        %v1435 = vpop.trf.xlu0
        %v1436 = vpop.trf.xlu0
        %v1437 = vpop.trf.xlu0
        %v1438 = vpop.trf.xlu0
        %v1439 = vpop.trf.xlu0
        %v1440 = vpop.trf.xlu0
        %v1441 = vpop.trf.xlu0
        %v1442 = vpop.trf.xlu0
        %v1443 = vpop.trf.xlu0
        %v1444 = vpop.trf.xlu0
        %v1445 = vpop.trf.xlu0
        %v1446 = vpack.c.bf16 %v1399, %v1398
        %v1447 = vpack.c.bf16 %v1431, %v1430
        %v1448 = vpack.c.bf16 %v1401, %v1400
        %v1449 = vpack.c.bf16 %v1433, %v1432
        %v1450 = vpack.c.bf16 %v1403, %v1402
        %v1451 = vpack.c.bf16 %v1435, %v1434
        %v1452 = vpack.c.bf16 %v1405, %v1404
        %v1453 = vpack.c.bf16 %v1437, %v1436
        %v1454 = vpack.c.bf16 %v1407, %v1406
        %v1455 = vpack.c.bf16 %v1439, %v1438
        %v1456 = vpack.c.bf16 %v1409, %v1408
        %v1457 = vpack.c.bf16 %v1441, %v1440
        %v1458 = vpack.c.bf16 %v1411, %v1410
        %v1459 = vpack.c.bf16 %v1443, %v1442
        %v1460 = vpack.c.bf16 %v1413, %v1412
        %v1461 = vpack.c.bf16 %v1445, %v1444
        %v1478 = vunpack.c.l.b16 %v1446
        %v1479 = vunpack.c.l.b16 %v1447
        %v1480 = vunpack.c.h.b16 %v1446
        %v1481 = vunpack.c.h.b16 %v1447
        %v1482 = vunpack.c.l.b16 %v1448
        %v1483 = vunpack.c.l.b16 %v1449
        %v1484 = vunpack.c.h.b16 %v1448
        %v1485 = vunpack.c.h.b16 %v1449
        %v1486 = vunpack.c.l.b16 %v1450
        %v1487 = vunpack.c.l.b16 %v1451
        %v1488 = vunpack.c.h.b16 %v1450
        %v1489 = vunpack.c.h.b16 %v1451
        %v1490 = vunpack.c.l.b16 %v1452
        %v1491 = vunpack.c.l.b16 %v1453
        %v1492 = vunpack.c.h.b16 %v1452
        %v1493 = vunpack.c.h.b16 %v1453
        %v1494 = vunpack.c.l.b16 %v1454
        %v1495 = vunpack.c.l.b16 %v1455
        %v1496 = vunpack.c.h.b16 %v1454
        %v1497 = vunpack.c.h.b16 %v1455
        %v1498 = vunpack.c.l.b16 %v1456
        %v1499 = vunpack.c.l.b16 %v1457
        %v1500 = vunpack.c.h.b16 %v1456
        %v1501 = vunpack.c.h.b16 %v1457
        %v1502 = vunpack.c.l.b16 %v1458
        %v1503 = vunpack.c.l.b16 %v1459
        %v1504 = vunpack.c.h.b16 %v1458
        %v1505 = vunpack.c.h.b16 %v1459
        %v1506 = vunpack.c.l.b16 %v1460
        %v1507 = vunpack.c.l.b16 %v1461
        %v1508 = vunpack.c.h.b16 %v1460
        %v1509 = vunpack.c.h.b16 %v1461
        %v1510 = vpack.c.b16 %v1479, %v1478
        %v1511 = vpack.c.b16 %v1481, %v1480
        %v1512 = vpack.c.b16 %v1483, %v1482
        %v1513 = vpack.c.b16 %v1485, %v1484
        %v1514 = vpack.c.b16 %v1487, %v1486
        %v1515 = vpack.c.b16 %v1489, %v1488
        %v1516 = vpack.c.b16 %v1491, %v1490
        %v1517 = vpack.c.b16 %v1493, %v1492
        %v1518 = vpack.c.b16 %v1495, %v1494
        %v1519 = vpack.c.b16 %v1497, %v1496
        %v1520 = vpack.c.b16 %v1499, %v1498
        %v1521 = vpack.c.b16 %v1501, %v1500
        %v1522 = vpack.c.b16 %v1503, %v1502
        %v1523 = vpack.c.b16 %v1505, %v1504
        %v1524 = vpack.c.b16 %v1507, %v1506
        %v1525 = vpack.c.b16 %v1509, %v1508
        %1542 = vst [vmem:[%s350] sm:$0xff] %v1510
        %1543 = vst [vmem:[%s350 + $0x8] sm:$0xff] %v1511
        %1544 = vst [vmem:[%s350 + $0x10] sm:$0xff] %v1512
        %1545 = vst [vmem:[%s350 + $0x18] sm:$0xff] %v1513
        %1546 = vst [vmem:[%s350 + $0x20] sm:$0xff] %v1514
        %1547 = vst [vmem:[%s350 + $0x28] sm:$0xff] %v1515
        %1548 = vst [vmem:[%s350 + $0x30] sm:$0xff] %v1516
        %1549 = vst [vmem:[%s350 + $0x38] sm:$0xff] %v1517
        %1550 = vst [vmem:[%s350 + $0x40] sm:$0xff] %v1518
        %1551 = vst [vmem:[%s350 + $0x48] sm:$0xff] %v1519
        %1552 = vst [vmem:[%s350 + $0x50] sm:$0xff] %v1520
        %1553 = vst [vmem:[%s350 + $0x58] sm:$0xff] %v1521
        %1554 = vst [vmem:[%s350 + $0x60] sm:$0xff] %v1522
        %1555 = vst [vmem:[%s350 + $0x68] sm:$0xff] %v1523
        %1556 = vst [vmem:[%s350 + $0x70] sm:$0xff] %v1524
        %1557 = vst [vmem:[%s350 + $0x78] sm:$0xff] %v1525
        %v1558 = vpack.c.bf16 %v1099, %v1096
        %v1559 = vpack.c.bf16 %v1107, %v1104
        %v1560 = vpack.c.bf16 %v1115, %v1112
        %v1561 = vpack.c.bf16 %v1123, %v1120
        %v1562 = vpack.c.bf16 %v1131, %v1128
        %v1563 = vpack.c.bf16 %v1139, %v1136
        %v1564 = vpack.c.bf16 %v1147, %v1144
        %v1565 = vpack.c.bf16 %v1155, %v1152
        %v1566 = vpack.c.bf16 %v1163, %v1160
        %v1567 = vpack.c.bf16 %v1171, %v1168
        %v1568 = vpack.c.bf16 %v1179, %v1176
        %v1569 = vpack.c.bf16 %v1187, %v1184
        %v1570 = vpack.c.bf16 %v1195, %v1192
        %v1571 = vpack.c.bf16 %v1203, %v1200
        %v1572 = vpack.c.bf16 %v1211, %v1208
        %v1573 = vpack.c.bf16 %v1219, %v1216
        %v1590 = vunpack.c.l.b16 %v1558
        %v1591 = vunpack.c.h.b16 %v1558
        %v1592 = vunpack.c.l.b16 %v1559
        %v1593 = vunpack.c.h.b16 %v1559
        %v1594 = vunpack.c.l.b16 %v1560
        %v1595 = vunpack.c.h.b16 %v1560
        %v1596 = vunpack.c.l.b16 %v1561
        %v1597 = vunpack.c.h.b16 %v1561
        %v1598 = vunpack.c.l.b16 %v1562
        %v1599 = vunpack.c.h.b16 %v1562
        %v1600 = vunpack.c.l.b16 %v1563
        %v1601 = vunpack.c.h.b16 %v1563
        %v1602 = vunpack.c.l.b16 %v1564
        %v1603 = vunpack.c.h.b16 %v1564
        %v1604 = vunpack.c.l.b16 %v1565
        %v1605 = vunpack.c.h.b16 %v1565
        %v1606 = vunpack.c.l.b16 %v1566
        %v1607 = vunpack.c.h.b16 %v1566
        %v1608 = vunpack.c.l.b16 %v1567
        %v1609 = vunpack.c.h.b16 %v1567
        %v1610 = vunpack.c.l.b16 %v1568
        %v1611 = vunpack.c.h.b16 %v1568
        %v1612 = vunpack.c.l.b16 %v1569
        %v1613 = vunpack.c.h.b16 %v1569
        %v1614 = vunpack.c.l.b16 %v1570
        %v1615 = vunpack.c.h.b16 %v1570
        %v1616 = vunpack.c.l.b16 %v1571
        %v1617 = vunpack.c.h.b16 %v1571
        %v1618 = vunpack.c.l.b16 %v1572
        %v1619 = vunpack.c.h.b16 %v1572
        %v1620 = vunpack.c.l.b16 %v1573
        %v1621 = vunpack.c.h.b16 %v1573
        %v1622 = vpack.c.b16 %v1590, %v1590
        %v1623 = vpack.c.b16 %v1591, %v1591
        %v1624 = vpack.c.b16 %v1592, %v1592
        %v1625 = vpack.c.b16 %v1593, %v1593
        %v1626 = vpack.c.b16 %v1594, %v1594
        %v1627 = vpack.c.b16 %v1595, %v1595
        %v1628 = vpack.c.b16 %v1596, %v1596
        %v1629 = vpack.c.b16 %v1597, %v1597
        %v1630 = vpack.c.b16 %v1598, %v1598
        %v1631 = vpack.c.b16 %v1599, %v1599
        %v1632 = vpack.c.b16 %v1600, %v1600
        %v1633 = vpack.c.b16 %v1601, %v1601
        %v1634 = vpack.c.b16 %v1602, %v1602
        %v1635 = vpack.c.b16 %v1603, %v1603
        %v1636 = vpack.c.b16 %v1604, %v1604
        %v1637 = vpack.c.b16 %v1605, %v1605
        %v1638 = vpack.c.b16 %v1606, %v1606
        %v1639 = vpack.c.b16 %v1607, %v1607
        %v1640 = vpack.c.b16 %v1608, %v1608
        %v1641 = vpack.c.b16 %v1609, %v1609
        %v1642 = vpack.c.b16 %v1610, %v1610
        %v1643 = vpack.c.b16 %v1611, %v1611
        %v1644 = vpack.c.b16 %v1612, %v1612
        %v1645 = vpack.c.b16 %v1613, %v1613
        %v1646 = vpack.c.b16 %v1614, %v1614
        %v1647 = vpack.c.b16 %v1615, %v1615
        %v1648 = vpack.c.b16 %v1616, %v1616
        %v1649 = vpack.c.b16 %v1617, %v1617
        %v1650 = vpack.c.b16 %v1618, %v1618
        %v1651 = vpack.c.b16 %v1619, %v1619
        %v1652 = vpack.c.b16 %v1620, %v1620
        %v1653 = vpack.c.b16 %v1621, %v1621
        %1686 = vst [vmem:[%s357] sm:$0xf] %v1622
        %1687 = vst [vmem:[%s357 + $0x4] sm:$0xf] %v1623
        %1688 = vst [vmem:[%s357 + $0x8] sm:$0xf] %v1624
        %1689 = vst [vmem:[%s357 + $0xc] sm:$0xf] %v1625
        %1690 = vst [vmem:[%s357 + $0x10] sm:$0xf] %v1626
        %1691 = vst [vmem:[%s357 + $0x14] sm:$0xf] %v1627
        %1692 = vst [vmem:[%s357 + $0x18] sm:$0xf] %v1628
        %1693 = vst [vmem:[%s357 + $0x1c] sm:$0xf] %v1629
        %1694 = vst [vmem:[%s357 + $0x20] sm:$0xf] %v1630
        %1695 = vst [vmem:[%s357 + $0x24] sm:$0xf] %v1631
        %1696 = vst [vmem:[%s357 + $0x28] sm:$0xf] %v1632
        %1697 = vst [vmem:[%s357 + $0x2c] sm:$0xf] %v1633
        %1698 = vst [vmem:[%s357 + $0x30] sm:$0xf] %v1634
        %1699 = vst [vmem:[%s357 + $0x34] sm:$0xf] %v1635
        %1700 = vst [vmem:[%s357 + $0x38] sm:$0xf] %v1636
        %1701 = vst [vmem:[%s357 + $0x3c] sm:$0xf] %v1637
        %1702 = vst [vmem:[%s357 + $0x40] sm:$0xf] %v1638
        %1703 = vst [vmem:[%s357 + $0x44] sm:$0xf] %v1639
        %1704 = vst [vmem:[%s357 + $0x48] sm:$0xf] %v1640
        %1705 = vst [vmem:[%s357 + $0x4c] sm:$0xf] %v1641
        %1706 = vst [vmem:[%s357 + $0x50] sm:$0xf] %v1642
        %1707 = vst [vmem:[%s357 + $0x54] sm:$0xf] %v1643
        %1708 = vst [vmem:[%s357 + $0x58] sm:$0xf] %v1644
        %1709 = vst [vmem:[%s357 + $0x5c] sm:$0xf] %v1645
        %1710 = vst [vmem:[%s357 + $0x60] sm:$0xf] %v1646
        %1711 = vst [vmem:[%s357 + $0x64] sm:$0xf] %v1647
        %1712 = vst [vmem:[%s357 + $0x68] sm:$0xf] %v1648
        %1713 = vst [vmem:[%s357 + $0x6c] sm:$0xf] %v1649
        %1714 = vst [vmem:[%s357 + $0x70] sm:$0xf] %v1650
        %1715 = vst [vmem:[%s357 + $0x74] sm:$0xf] %v1651
        %1716 = vst [vmem:[%s357 + $0x78] sm:$0xf] %v1652
        %1717 = vst [vmem:[%s357 + $0x7c] sm:$0xf] %v1653
        %s1718 = sand.u32 %s163, 1
        %s1719 = scalar_lea.sflag [#allocation3], %s1718
        %s1720 = sand.u32 %s163, 1
        %s1721 = smul.addr %s1720, 256
        %s1722 = scalar_lea.vmem [#allocation2], %s1721
        %s1723 = sand.u32 %s29, 1
        %s1724 = scalar_lea.sflag [#allocation5], %s1723
        %s1725 = sand.u32 %s191, 1
        %s1726 = smul.addr %s1725, 128
        %s1727 = scalar_lea.vmem [#allocation4], %s1726
        %s1728 = sand.u32 %s29, 1
        %s1729 = scalar_lea.sflag [#allocation5], %s1728
        %s1730 = sand.u32 %s219, 1
        %s1731 = smul.addr %s1730, 128
        %s1732 = scalar_lea.vmem [#allocation6], %s1731
        %s1733 = sand.u32 %s247, 1
        %s1734 = scalar_lea.sflag [#allocation8], %s1733
        %s1735 = sand.u32 %s247, 1
        %s1736 = smul.addr %s1735, 128
        %s1737 = scalar_lea.vmem [#allocation7], %s1736
        // Predicated region
        $region41: #{tpu_custom_call.1} parent=39 // pred_check
          %p1738 = pneg %p173
        $region42: #{tpu_custom_call.1} parent=39 // pred_check_branch
          %1740 = sbr.rel (%p1738) target = $region44
        $region43: #{tpu_custom_call.1} parent=39 // pred_region
          %s1741 = smul.u32 32, %s34
          %s1743 = ssub.s32 4096, 4096
          %1744 = vsyncadd %s1719, %s1743
          %s1745 = smul.addr %s33, 32
          %s1746 = sadd.s32 %s1741, %s1745
          %s1747 = smul.addr %s1746, 128
          %s1748 = scalar_lea.hbm %s5, %s1747
          %s1749 = sshll.u32 %s1722, 4
          %s1750 = int_to_ptr.vmem [resolvable:$true] %s1749
          %1755 = dma.vmem_to_hbm [thread:$0]  %s1750, 4096, %s1748, %s1719, 128, 128, 8
        $region44: #{tpu_custom_call.1} parent=39 // pred_fallthru
          _
        // Predicated region
        $region45: #{tpu_custom_call.1} parent=39 // pred_check
          %p1756 = pneg %p201
        $region46: #{tpu_custom_call.1} parent=39 // pred_check_branch
          %1758 = sbr.rel (%p1756) target = $region48
        $region47: #{tpu_custom_call.1} parent=39 // pred_region
          %s1759 = smul.u32 32, %s34
          %s1761 = ssub.s32 2048, 2048
          %1762 = vsyncadd %s1724, %s1761
          %s1763 = smul.addr %s33, 32
          %s1764 = sadd.s32 %s1759, %s1763
          %s1765 = smul.addr %s1764, 64
          %s1766 = scalar_lea.hbm %s6, %s1765
          %s1767 = sshll.u32 %s1727, 4
          %s1768 = int_to_ptr.vmem [resolvable:$true] %s1767
          %1773 = dma.vmem_to_hbm [thread:$0]  %s1768, 2048, %s1766, %s1724, 64, 64, 4
        $region48: #{tpu_custom_call.1} parent=39 // pred_fallthru
          _
        // Predicated region
        $region49: #{tpu_custom_call.1} parent=39 // pred_check
          %p1774 = pneg %p229
        $region50: #{tpu_custom_call.1} parent=39 // pred_check_branch
          %1776 = sbr.rel (%p1774) target = $region52
        $region51: #{tpu_custom_call.1} parent=39 // pred_region
          %s1777 = smul.u32 2, %s34
          %s1779 = ssub.s32 2048, 2048
          %1780 = vsyncadd %s1729, %s1779
          %s1781 = smul.addr %s33, 32
          %s1782 = sadd.s32 %s1777, %s1781
          %s1783 = smul.addr %s1782, 64
          %s1784 = scalar_lea.hbm %s7, %s1783
          %s1785 = sshll.u32 %s1732, 4
          %s1786 = int_to_ptr.vmem [resolvable:$true] %s1785
          %1791 = dma.vmem_to_hbm [thread:$0]  %s1786, 2048, %s1784, %s1729, 128, 128, 8
        $region52: #{tpu_custom_call.1} parent=39 // pred_fallthru
          _
        // Predicated region
        $region53: #{tpu_custom_call.1} parent=39 // pred_check
          %p1792 = pneg %p257
        $region54: #{tpu_custom_call.1} parent=39 // pred_check_branch
          %1794 = sbr.rel (%p1792) target = $region56
        $region55: #{tpu_custom_call.1} parent=39 // pred_region
          %s1795 = smul.u32 32, %s34
          %s1797 = ssub.s32 2048, 2048
          %1798 = vsyncadd %s1734, %s1797
          %s1799 = smul.addr %s33, 32
          %s1800 = sadd.s32 %s1795, %s1799
          %s1801 = smul.addr %s1800, 64
          %s1802 = scalar_lea.hbm %s8, %s1801
          %s1803 = sshll.u32 %s1737, 4
          %s1804 = int_to_ptr.vmem [resolvable:$true] %s1803
          %1809 = dma.vmem_to_hbm [thread:$0]  %s1804, 2048, %s1802, %s1734, 64, 64, 4
        $region56: #{tpu_custom_call.1} parent=39 // pred_fallthru
          _
      $region40: #{tpu_custom_call.1} parent=5 // pred_fallthru
        _
      %p1810 = scmp.le.s32.totalorder 2, %s24
      // Predicated region
      $region57: #{tpu_custom_call.1} parent=5 // pred_check
        %p1811 = pneg %p1810
      $region58: #{tpu_custom_call.1} parent=5 // pred_check_branch
        %1813 = sbr.rel (%p1811) target = $region60
      $region59: #{tpu_custom_call.1} parent=5 // pred_region
        %s1814 = ssub.s32 %s24, 2
        // Predicated region
        $region61: #{tpu_custom_call.1} parent=59 // pred_check
          %p1815 = pneg %p179
        $region62: #{tpu_custom_call.1} parent=59 // pred_check_branch
          %1817 = sbr.rel (%p1815) target = $region64
        $region63: #{tpu_custom_call.1} parent=59 // pred_region
          %s1818 = sand.u32 %s164, 1
          %s1819 = scalar_lea.sflag [#allocation3], %s1818
          %s1820 = sand.u32 %s164, 1
          %s1821 = smul.addr %s1820, 256
          %s1822 = scalar_lea.vmem [#allocation2], %s1821
          %1823 = dma.done %s1819, 4096
        $region64: #{tpu_custom_call.1} parent=59 // pred_fallthru
          _
        // Predicated region
        $region65: #{tpu_custom_call.1} parent=59 // pred_check
          %p1824 = pneg %p207
        $region66: #{tpu_custom_call.1} parent=59 // pred_check_branch
          %1826 = sbr.rel (%p1824) target = $region68
        $region67: #{tpu_custom_call.1} parent=59 // pred_region
          %s1827 = sand.u32 %s30, 1
          %s1828 = scalar_lea.sflag [#allocation5], %s1827
          %s1829 = sand.u32 %s192, 1
          %s1830 = smul.addr %s1829, 128
          %s1831 = scalar_lea.vmem [#allocation4], %s1830
          %1832 = dma.done %s1828, 2048
        $region68: #{tpu_custom_call.1} parent=59 // pred_fallthru
          _
        // Predicated region
        $region69: #{tpu_custom_call.1} parent=59 // pred_check
          %p1833 = pneg %p235
        $region70: #{tpu_custom_call.1} parent=59 // pred_check_branch
          %1835 = sbr.rel (%p1833) target = $region72
        $region71: #{tpu_custom_call.1} parent=59 // pred_region
          %s1836 = sand.u32 %s30, 1
          %s1837 = scalar_lea.sflag [#allocation5], %s1836
          %s1838 = sand.u32 %s220, 1
          %s1839 = smul.addr %s1838, 128
          %s1840 = scalar_lea.vmem [#allocation6], %s1839
          %1841 = dma.done %s1837, 2048
        $region72: #{tpu_custom_call.1} parent=59 // pred_fallthru
          _
        // Predicated region
        $region73: #{tpu_custom_call.1} parent=59 // pred_check
          %p1842 = pneg %p263
        $region74: #{tpu_custom_call.1} parent=59 // pred_check_branch
          %1844 = sbr.rel (%p1842) target = $region76
        $region75: #{tpu_custom_call.1} parent=59 // pred_region
          %s1845 = sand.u32 %s248, 1
          %s1846 = scalar_lea.sflag [#allocation8], %s1845
          %s1847 = sand.u32 %s248, 1
          %s1848 = smul.addr %s1847, 128
          %s1849 = scalar_lea.vmem [#allocation7], %s1848
          %1850 = dma.done %s1846, 2048
        $region76: #{tpu_custom_call.1} parent=59 // pred_fallthru
          _
      $region60: #{tpu_custom_call.1} parent=5 // pred_fallthru
        _
    $region6: #{tpu_custom_call.1} parent=1 // loop_footer
      %s28 = sadd.s32 1, %s24
    $region7: #{tpu_custom_call.1} parent=1 // loop_footer_branch
      %23 = sbr.rel target = $region3
    $region8: #{tpu_custom_call.1} parent=1 // loop_exit
      _
    %1851 = vsyncpa [#allocation3], 1
    %s1852 = scalar_lea.sflag [#allocation3], 1
    %1853 = vsyncpa %s1852, 1
    %1854 = vsyncpa [#allocation5], 1
    %s1855 = scalar_lea.sflag [#allocation5], 1
    %1856 = vsyncpa %s1855, 1
    %1857 = vsyncpa [#allocation8], 1
    %s1858 = scalar_lea.sflag [#allocation8], 1
    %1859 = vsyncpa %s1858, 1

</llo_original>
